<compile_context>
chip_gen: v7x
topology: tpu7x:2x2x1
jax: 0.10.0
libtpu: 0.0.40
codegen_flags: <defaults>
</compile_context>

<pallas_src>
import jax
import jax.numpy as jnp
import numpy as np
from jax.experimental import pallas as pl
from jax.experimental.pallas import tpu as pltpu

_EPS = 1e-5                                                  # BatchNorm1d default eps
_LAYER_CFGS = ((4, 2, 1), (3, 1, 1), (4, 2, 1), (3, 1, 1))   # (kernel, stride, padding)
_CIN_PAD0 = 8                                                # pad the 1-channel input to 8 lanes


# ----------------------- host-side weight preprocessing (runs once) -----------------------
def _phase_packed_convt_mats(w, p_in, stride, padding, c_in_pad):
    """Phase-packed ConvTranspose1d weights.

    Activations are stored as A[n*L0 + m, j*C_in + c] == x[n, m*p_in + j, c].
    The transposed convolution becomes
        y[row + d] += A[row] @ M_d      for d in (-1, 0, +1),
    with M_d of shape (p_in*c_in_pad, p_out*c_out) holding only real taps (stride
    zero-insertion, edge padding and the tap flip are all folded in here).
    """
    c_in, c_out, k = (int(s) for s in w.shape)
    p_out = p_in * stride
    w_np = np.asarray(w, dtype=np.float32)
    mats = {d: np.zeros((p_in * c_in_pad, p_out * c_out), np.float32) for d in (-1, 0, 1)}
    for j_in in range(p_in):
        for t in range(k):
            delta = j_in * stride - padding + t              # packed output offset
            d, j_out = divmod(delta, p_out)                  # sublane shift, output phase
            assert d in (-1, 0, 1)
            r0, c0 = j_in * c_in_pad, j_out * c_out
            mats[d][r0:r0 + c_in, c0:c0 + c_out] += w_np[:, :, t]
    return mats, p_out


def prepare_decoder_params(params, matmul_dtype=jnp.bfloat16):
    """Host-side precompute of phase-packed weight matrices (once per weight update)."""
    prepped = []
    p_in, c_in_pad = 1, _CIN_PAD0
    for (k, s, pad), prm in zip(_LAYER_CFGS, params):
        c_out = int(prm['w'].shape[1])
        mats, p_out = _phase_packed_convt_mats(prm['w'], p_in, s, pad, c_in_pad)
        prepped.append(dict(
            wm=jnp.asarray(mats[-1], matmul_dtype),          # taps landing one row up
            w0=jnp.asarray(mats[0], matmul_dtype),           # same row
            wp=jnp.asarray(mats[1], matmul_dtype),           # one row down
            gamma=jnp.asarray(prm['gamma'], jnp.float32).reshape(1, c_out),
            beta=jnp.asarray(prm['beta'], jnp.float32).reshape(1, c_out),
            c_out=c_out, p_out=p_out))
        # prm['b'] (ConvTranspose bias) is intentionally dropped: training-mode BN
        # subtracts the batch mean, which cancels any per-channel constant exactly.
        p_in, c_in_pad = p_out, c_out
    return prepped


# --------------------------------------- kernel ---------------------------------------
def _make_kernel(l0, layer_meta):
    n_layers = len(layer_meta)

    def kernel(*refs):
        x_ref, layer_refs, o_ref = refs[0], refs[1:-1], refs[-1]

        h = x_ref[...]                                       # (R, 8) f32, R = N*L0, VMEM-resident
        r = h.shape[0]
        # Per-sample row index m (sublanes pack N samples of L0 rows each); the two masks
        # gate the +-1 sublane shifts so contributions never cross sample boundaries.
        m_idx = jax.lax.broadcasted_iota(jnp.int32, (r, 1), 0) % l0
        not_first = (m_idx != 0).astype(jnp.float32)
        not_last = (m_idx != l0 - 1).astype(jnp.float32)

        for li in range(n_layers):
            wm_ref, w0_ref, wp_ref, g_ref, b_ref = layer_refs[5 * li:5 * li + 5]
            c, p = layer_meta[li]                            # (C_out, phase factor P_out)

            # --- ConvTranspose1d: 3 banded matmuls (bf16 operands, f32 accumulate). ---
            hb = h.astype(w0_ref.dtype)
            y0 = jnp.dot(hb, w0_ref[...], preferred_element_type=jnp.float32)
            ym = jnp.dot(hb, wm_ref[...], preferred_element_type=jnp.float32)
            yp = jnp.dot(hb, wp_ref[...], preferred_element_type=jnp.float32)
            zrow = jnp.zeros_like(y0[:1, :])
            # d = -1: value computed at row r lands at row r-1 -> shift rows up.
            y_up = jnp.concatenate([ym[1:, :], zrow], axis=0) * not_last
            # d = +1: value computed at row r lands at row r+1 -> shift rows down.
            y_dn = jnp.concatenate([zrow, yp[:-1, :]], axis=0) * not_first
            y = y0 + y_up + y_dn                             # (R, P*C) f32

            # --- BatchNorm1d (training-mode batch stats), two-pass, f32 throughout. ---
            inv_cnt = 1.0 / float(r * p)                     # N * L_out elements per channel
            s1 = jnp.sum(y, axis=0, keepdims=True)           # (1, P*C)
            mean = s1[:, 0:c]
            for j in range(1, p):                            # sum the P phase chunks
                mean = mean + s1[:, j * c:(j + 1) * c]
            mean = mean * inv_cnt                            # (1, C)
            diff = y - jnp.concatenate([mean] * p, axis=1)
            s2 = jnp.sum(diff * diff, axis=0, keepdims=True)
            var = s2[:, 0:c]
            for j in range(1, p):
                var = var + s2[:, j * c:(j + 1) * c]
            var = var * inv_cnt
            scale = g_ref[...] * jax.lax.rsqrt(var + _EPS)   # (1, C)
            scale_w = jnp.concatenate([scale] * p, axis=1)
            beta_w = jnp.concatenate([b_ref[...]] * p, axis=1)

            # --- Folded BN + ReLU: one FMA + max VPU pass, f32. ---
            h = jnp.maximum(diff * scale_w + beta_w, 0.0)

        o_ref[...] = h

    return kernel


# --------------------------------------- wrapper ---------------------------------------
def decoder_resnet18_forward(x, prepped):
    """x: (N, L, 1), as the PyTorch module receives it. Returns (N, 1, 4*L) (NCL)."""
    n, l0, c0 = x.shape
    assert c0 == 1
    # Flat phase-packed activation layout: rows = N*L0, lanes = channels (padded 1 -> 8).
    h0 = x.astype(jnp.float32).reshape(n * l0, c0)
    h0 = jnp.pad(h0, ((0, 0), (0, _CIN_PAD0 - c0)))

    args = [h0]
    for lp in prepped:
        args += [lp['wm'], lp['w0'], lp['wp'], lp['gamma'], lp['beta']]
    layer_meta = tuple((lp['c_out'], lp['p_out']) for lp in prepped)
    c_last, p_last = layer_meta[-1]

    vmem = pl.BlockSpec(memory_space=pltpu.MemorySpace.VMEM)
    out = pl.pallas_call(
        _make_kernel(l0, layer_meta),
        out_shape=jax.ShapeDtypeStruct((n * l0, p_last * c_last), jnp.float32),
        in_specs=[vmem] * len(args),
        out_specs=vmem,
    )(*args)

    # Unpack phases back to torch NCL: row n*L0+m, lane j*C+c  ->  (n, c, m*P + j).
    out = out.reshape(n, l0, p_last, c_last)
    out = jnp.transpose(out, (0, 3, 1, 2)).reshape(n, c_last, l0 * p_last)
    return out


# ----------------- pure-JAX reference (direct ConvTranspose1d definition) -----------------
def _conv_transpose1d_ref(x_ncl, w, b, stride, padding):
    n, _, l = x_ncl.shape
    _, c_out, k = w.shape
    l_full = (l - 1) * stride + k
    contrib = jnp.einsum('ncl,cdk->ndlk', x_ncl, w)
    out = jnp.zeros((n, c_out, l_full), jnp.float32)
    for li in range(l):
        out = out.at[:, :, li * stride:li * stride + k].add(contrib[:, :, li, :])
    l_out = (l - 1) * stride - 2 * padding + k
    return out[:, :, padding:padding + l_out] + b[None, :, None]


def _reference_forward(x, params, matmul_dtype=jnp.float32):
    """Pure-JAX reference.  matmul_dtype=bfloat16 mimics the kernel's MXU operand rounding."""
    h = jnp.transpose(x, (0, 2, 1)).astype(jnp.float32)      # torch.transpose(x, 1, 2) -> NCL
    for (k, s, p), prm in zip(_LAYER_CFGS, params):
        hm = h.astype(matmul_dtype).astype(jnp.float32)
        wm = prm['w'].astype(matmul_dtype).astype(jnp.float32)
        h = _conv_transpose1d_ref(hm, wm, prm['b'].astype(jnp.float32), s, p)
        mean = jnp.mean(h, axis=(0, 2), keepdims=True)
        var = jnp.mean((h - mean) ** 2, axis=(0, 2), keepdims=True)
        h = (h - mean) * jax.lax.rsqrt(var + _EPS) * prm['gamma'][None, :, None] \
            + prm['beta'][None, :, None]
        h = jnp.maximum(h, 0.0)
    return h


if __name__ == "__main__":
    key = jax.random.PRNGKey(0)
    N, L = 2, 8
    x = jax.random.normal(key, (N, L, 1), jnp.float32)

    # deterministic parameter init (shapes from the module __init__)
    layer_dims = ((1, 32, 4), (32, 32, 3), (32, 32, 4), (32, 1, 3))
    params = []
    for i, (cin, cout, k) in enumerate(layer_dims):
        kw, kb = jax.random.split(jax.random.fold_in(key, i + 1))
        bound = 1.0 / float(cout * k) ** 0.5
        params.append(dict(
            w=jax.random.uniform(kw, (cin, cout, k), jnp.float32, -bound, bound),
            b=jax.random.uniform(kb, (cout,), jnp.float32, -bound, bound),
            gamma=jnp.ones((cout,), jnp.float32),            # BatchNorm default init
            beta=jnp.zeros((cout,), jnp.float32)))

    # Production path: bf16 MXU operands, f32 accumulate / BN / ReLU.
    out_bf16 = decoder_resnet18_forward(x, prepare_decoder_params(params, jnp.bfloat16))
    out_bf16 = jax.block_until_ready(out_bf16)
    assert out_bf16.shape == (N, 1, 4 * L), out_bf16.shape
    ref_bf16 = _reference_forward(x, params, matmul_dtype=jnp.bfloat16)
    assert jnp.allclose(out_bf16, ref_bf16, atol=5e-3, rtol=5e-3), \
        float(jnp.max(jnp.abs(out_bf16 - ref_bf16)))
    ref_f32 = _reference_forward(x, params, matmul_dtype=jnp.float32)
    assert jnp.allclose(out_bf16, ref_f32, atol=1e-1, rtol=1e-1), \
        float(jnp.max(jnp.abs(out_bf16 - ref_f32)))          # bf16-rounding-sized slack

    # Full-f32 path, checked tightly against the exact reference semantics.
    out_f32 = decoder_resnet18_forward(x, prepare_decoder_params(params, jnp.float32))
    out_f32 = jax.block_until_ready(out_f32)
    assert jnp.allclose(out_f32, ref_f32, atol=2e-3, rtol=2e-3), \
        float(jnp.max(jnp.abs(out_f32 - ref_f32)))

    print("KERNEL_OK")
</pallas_src>

<mosaic_0001>
module attributes {stable_mosaic.version = 11 : i64} {
  func.func @kernel(%arg0: memref<16x8xf32, #tpu.memory_space<vmem>>, %arg1: memref<8x64xbf16, #tpu.memory_space<vmem>>, %arg2: memref<8x64xbf16, #tpu.memory_space<vmem>>, %arg3: memref<8x64xbf16, #tpu.memory_space<vmem>>, %arg4: memref<1x32xf32, #tpu.memory_space<vmem>>, %arg5: memref<1x32xf32, #tpu.memory_space<vmem>>, %arg6: memref<64x64xbf16, #tpu.memory_space<vmem>>, %arg7: memref<64x64xbf16, #tpu.memory_space<vmem>>, %arg8: memref<64x64xbf16, #tpu.memory_space<vmem>>, %arg9: memref<1x32xf32, #tpu.memory_space<vmem>>, %arg10: memref<1x32xf32, #tpu.memory_space<vmem>>, %arg11: memref<64x128xbf16, #tpu.memory_space<vmem>>, %arg12: memref<64x128xbf16, #tpu.memory_space<vmem>>, %arg13: memref<64x128xbf16, #tpu.memory_space<vmem>>, %arg14: memref<1x32xf32, #tpu.memory_space<vmem>>, %arg15: memref<1x32xf32, #tpu.memory_space<vmem>>, %arg16: memref<128x4xbf16, #tpu.memory_space<vmem>>, %arg17: memref<128x4xbf16, #tpu.memory_space<vmem>>, %arg18: memref<128x4xbf16, #tpu.memory_space<vmem>>, %arg19: memref<1x1xf32, #tpu.memory_space<vmem>>, %arg20: memref<1x1xf32, #tpu.memory_space<vmem>>, %arg21: memref<16x4xf32, #tpu.memory_space<vmem>>) attributes {dimension_semantics = [], scalar_prefetch = 0 : i64, scratch_operands = 0 : i64, tpu.core_type = #tpu.core_type<tc>} {
    %c0 = arith.constant 0 : index
    %c0_0 = arith.constant 0 : index
    %0 = vector.load %arg0[%c0, %c0_0] : memref<16x8xf32, #tpu.memory_space<vmem>>, vector<16x8xf32>
    %1 = tpu.iota {dimensions = array<i32: 0>} : vector<16x1xi32>
    %c8_i32 = arith.constant 8 : i32
    %c0_i32 = arith.constant 0 : i32
    %2 = arith.cmpi eq, %c8_i32, %c0_i32 : i32
    %c1_i32 = arith.constant 1 : i32
    %3 = arith.select %2, %c1_i32, %c8_i32 : i32
    %4 = vector.broadcast %3 : i32 to vector<16x1xi32>
    %5 = arith.remsi %1, %4 : vector<16x1xi32>
    %c0_i32_1 = arith.constant 0 : i32
    %6 = vector.broadcast %c0_i32_1 : i32 to vector<16x1xi32>
    %7 = arith.cmpi ne, %5, %6 : vector<16x1xi32>
    %c0_i32_2 = arith.constant 0 : i32
    %8 = vector.broadcast %c0_i32_2 : i32 to vector<16x1xi32>
    %9 = arith.cmpi slt, %5, %8 : vector<16x1xi32>
    %c0_i32_3 = arith.constant 0 : i32
    %10 = arith.cmpi slt, %3, %c0_i32_3 : i32
    %11 = vector.broadcast %10 : i1 to vector<16x1xi1>
    %12 = vector.broadcast %11 : vector<16x1xi1> to vector<16x1xi1>
    %13 = arith.xori %9, %12 : vector<16x1xi1>
    %14 = arith.andi %13, %7 : vector<16x1xi1>
    %15 = vector.broadcast %3 : i32 to vector<16x1xi32>
    %16 = arith.addi %5, %15 : vector<16x1xi32>
    %17 = arith.select %14, %16, %5 : vector<16x1xi1>, vector<16x1xi32>
    %c0_i32_4 = arith.constant 0 : i32
    %18 = vector.broadcast %c0_i32_4 : i32 to vector<16x1xi32>
    %19 = arith.cmpi ne, %17, %18 : vector<16x1xi32>
    %20 = arith.extui %19 : vector<16x1xi1> to vector<16x1xi32>
    %21 = arith.sitofp %20 : vector<16x1xi32> to vector<16x1xf32>
    %c7_i32 = arith.constant 7 : i32
    %22 = vector.broadcast %c7_i32 : i32 to vector<16x1xi32>
    %23 = arith.cmpi ne, %17, %22 : vector<16x1xi32>
    %24 = arith.extui %23 : vector<16x1xi1> to vector<16x1xi32>
    %25 = arith.sitofp %24 : vector<16x1xi32> to vector<16x1xf32>
    %26 = arith.truncf %0 : vector<16x8xf32> to vector<16x8xbf16>
    %c0_5 = arith.constant 0 : index
    %c0_6 = arith.constant 0 : index
    %27 = vector.load %arg2[%c0_5, %c0_6] : memref<8x64xbf16, #tpu.memory_space<vmem>>, vector<8x64xbf16>
    %cst = arith.constant dense<0.000000e+00> : vector<16x64xf32>
    %28 = tpu.matmul %26, %27, %cst {dimension_numbers = #tpu.dot_dimension_numbers<[1], [0], [0], [1], [0, 0, 1, 1], [], []>} : vector<16x8xbf16>, vector<8x64xbf16>, vector<16x64xf32> -> vector<16x64xf32>
    %c0_7 = arith.constant 0 : index
    %c0_8 = arith.constant 0 : index
    %29 = vector.load %arg1[%c0_7, %c0_8] : memref<8x64xbf16, #tpu.memory_space<vmem>>, vector<8x64xbf16>
    %cst_9 = arith.constant dense<0.000000e+00> : vector<16x64xf32>
    %30 = tpu.matmul %26, %29, %cst_9 {dimension_numbers = #tpu.dot_dimension_numbers<[1], [0], [0], [1], [0, 0, 1, 1], [], []>} : vector<16x8xbf16>, vector<8x64xbf16>, vector<16x64xf32> -> vector<16x64xf32>
    %c0_10 = arith.constant 0 : index
    %c0_11 = arith.constant 0 : index
    %31 = vector.load %arg3[%c0_10, %c0_11] : memref<8x64xbf16, #tpu.memory_space<vmem>>, vector<8x64xbf16>
    %cst_12 = arith.constant dense<0.000000e+00> : vector<16x64xf32>
    %32 = tpu.matmul %26, %31, %cst_12 {dimension_numbers = #tpu.dot_dimension_numbers<[1], [0], [0], [1], [0, 0, 1, 1], [], []>} : vector<16x8xbf16>, vector<8x64xbf16>, vector<16x64xf32> -> vector<16x64xf32>
    %cst_13 = arith.constant 0.000000e+00 : f32
    %33 = vector.broadcast %cst_13 : f32 to vector<1x64xf32>
    %34 = vector.extract_strided_slice %30 {offsets = [1, 0], sizes = [15, 64], strides = [1, 1]} : vector<16x64xf32> to vector<15x64xf32>
    %35 = tpu.concatenate %34, %33 in 0 : vector<15x64xf32>, vector<1x64xf32> -> vector<16x64xf32>
    %36 = vector.broadcast %25 : vector<16x1xf32> to vector<16x64xf32>
    %37 = arith.mulf %35, %36 : vector<16x64xf32>
    %38 = vector.extract_strided_slice %32 {offsets = [0, 0], sizes = [15, 64], strides = [1, 1]} : vector<16x64xf32> to vector<15x64xf32>
    %39 = tpu.concatenate %33, %38 in 0 : vector<1x64xf32>, vector<15x64xf32> -> vector<16x64xf32>
    %40 = vector.broadcast %21 : vector<16x1xf32> to vector<16x64xf32>
    %41 = arith.mulf %39, %40 : vector<16x64xf32>
    %42 = arith.addf %28, %37 : vector<16x64xf32>
    %43 = arith.addf %42, %41 : vector<16x64xf32>
    %cst_14 = arith.constant dense<0.000000e+00> : vector<64xf32>
    %44 = vector.multi_reduction <add>, %43, %cst_14 [0] : vector<16x64xf32> to vector<64xf32>
    %45 = vector.shape_cast %44 : vector<64xf32> to vector<1x64xf32>
    %46 = vector.extract_strided_slice %45 {offsets = [0, 0], sizes = [1, 32], strides = [1, 1]} : vector<1x64xf32> to vector<1x32xf32>
    %47 = vector.extract_strided_slice %45 {offsets = [0, 32], sizes = [1, 32], strides = [1, 1]} : vector<1x64xf32> to vector<1x32xf32>
    %48 = arith.addf %46, %47 : vector<1x32xf32>
    %cst_15 = arith.constant 3.125000e-02 : f32
    %49 = vector.broadcast %cst_15 : f32 to vector<1x32xf32>
    %50 = arith.mulf %48, %49 : vector<1x32xf32>
    %51 = tpu.concatenate %50, %50 in 1 : vector<1x32xf32>, vector<1x32xf32> -> vector<1x64xf32>
    %52 = vector.broadcast %51 : vector<1x64xf32> to vector<16x64xf32>
    %53 = arith.subf %43, %52 : vector<16x64xf32>
    %54 = arith.mulf %53, %53 : vector<16x64xf32>
    %cst_16 = arith.constant dense<0.000000e+00> : vector<64xf32>
    %55 = vector.multi_reduction <add>, %54, %cst_16 [0] : vector<16x64xf32> to vector<64xf32>
    %56 = vector.shape_cast %55 : vector<64xf32> to vector<1x64xf32>
    %57 = vector.extract_strided_slice %56 {offsets = [0, 0], sizes = [1, 32], strides = [1, 1]} : vector<1x64xf32> to vector<1x32xf32>
    %58 = vector.extract_strided_slice %56 {offsets = [0, 32], sizes = [1, 32], strides = [1, 1]} : vector<1x64xf32> to vector<1x32xf32>
    %59 = arith.addf %57, %58 : vector<1x32xf32>
    %cst_17 = arith.constant 3.125000e-02 : f32
    %60 = vector.broadcast %cst_17 : f32 to vector<1x32xf32>
    %61 = arith.mulf %59, %60 : vector<1x32xf32>
    %c0_18 = arith.constant 0 : index
    %c0_19 = arith.constant 0 : index
    %62 = vector.load %arg4[%c0_18, %c0_19] : memref<1x32xf32, #tpu.memory_space<vmem>>, vector<1x32xf32>
    %cst_20 = arith.constant 9.99999974E-6 : f32
    %63 = vector.broadcast %cst_20 : f32 to vector<1x32xf32>
    %64 = arith.addf %61, %63 : vector<1x32xf32>
    %65 = math.rsqrt %64 : vector<1x32xf32>
    %66 = arith.mulf %62, %65 : vector<1x32xf32>
    %67 = tpu.concatenate %66, %66 in 1 : vector<1x32xf32>, vector<1x32xf32> -> vector<1x64xf32>
    %c0_21 = arith.constant 0 : index
    %c0_22 = arith.constant 0 : index
    %68 = vector.load %arg5[%c0_21, %c0_22] : memref<1x32xf32, #tpu.memory_space<vmem>>, vector<1x32xf32>
    %69 = tpu.concatenate %68, %68 in 1 : vector<1x32xf32>, vector<1x32xf32> -> vector<1x64xf32>
    %70 = vector.broadcast %67 : vector<1x64xf32> to vector<16x64xf32>
    %71 = arith.mulf %53, %70 : vector<16x64xf32>
    %72 = vector.broadcast %69 : vector<1x64xf32> to vector<16x64xf32>
    %73 = arith.addf %71, %72 : vector<16x64xf32>
    %cst_23 = arith.constant 0.000000e+00 : f32
    %74 = vector.broadcast %cst_23 : f32 to vector<16x64xf32>
    %75 = arith.maximumf %73, %74 : vector<16x64xf32>
    %76 = arith.truncf %75 : vector<16x64xf32> to vector<16x64xbf16>
    %c0_24 = arith.constant 0 : index
    %c0_25 = arith.constant 0 : index
    %77 = vector.load %arg7[%c0_24, %c0_25] : memref<64x64xbf16, #tpu.memory_space<vmem>>, vector<64x64xbf16>
    %cst_26 = arith.constant dense<0.000000e+00> : vector<16x64xf32>
    %78 = tpu.matmul %76, %77, %cst_26 {dimension_numbers = #tpu.dot_dimension_numbers<[1], [0], [0], [1], [0, 0, 1, 1], [], []>} : vector<16x64xbf16>, vector<64x64xbf16>, vector<16x64xf32> -> vector<16x64xf32>
    %c0_27 = arith.constant 0 : index
    %c0_28 = arith.constant 0 : index
    %79 = vector.load %arg6[%c0_27, %c0_28] : memref<64x64xbf16, #tpu.memory_space<vmem>>, vector<64x64xbf16>
    %cst_29 = arith.constant dense<0.000000e+00> : vector<16x64xf32>
    %80 = tpu.matmul %76, %79, %cst_29 {dimension_numbers = #tpu.dot_dimension_numbers<[1], [0], [0], [1], [0, 0, 1, 1], [], []>} : vector<16x64xbf16>, vector<64x64xbf16>, vector<16x64xf32> -> vector<16x64xf32>
    %c0_30 = arith.constant 0 : index
    %c0_31 = arith.constant 0 : index
    %81 = vector.load %arg8[%c0_30, %c0_31] : memref<64x64xbf16, #tpu.memory_space<vmem>>, vector<64x64xbf16>
    %cst_32 = arith.constant dense<0.000000e+00> : vector<16x64xf32>
    %82 = tpu.matmul %76, %81, %cst_32 {dimension_numbers = #tpu.dot_dimension_numbers<[1], [0], [0], [1], [0, 0, 1, 1], [], []>} : vector<16x64xbf16>, vector<64x64xbf16>, vector<16x64xf32> -> vector<16x64xf32>
    %cst_33 = arith.constant 0.000000e+00 : f32
    %83 = vector.broadcast %cst_33 : f32 to vector<1x64xf32>
    %84 = vector.extract_strided_slice %80 {offsets = [1, 0], sizes = [15, 64], strides = [1, 1]} : vector<16x64xf32> to vector<15x64xf32>
    %85 = tpu.concatenate %84, %83 in 0 : vector<15x64xf32>, vector<1x64xf32> -> vector<16x64xf32>
    %86 = vector.broadcast %25 : vector<16x1xf32> to vector<16x64xf32>
    %87 = arith.mulf %85, %86 : vector<16x64xf32>
    %88 = vector.extract_strided_slice %82 {offsets = [0, 0], sizes = [15, 64], strides = [1, 1]} : vector<16x64xf32> to vector<15x64xf32>
    %89 = tpu.concatenate %83, %88 in 0 : vector<1x64xf32>, vector<15x64xf32> -> vector<16x64xf32>
    %90 = vector.broadcast %21 : vector<16x1xf32> to vector<16x64xf32>
    %91 = arith.mulf %89, %90 : vector<16x64xf32>
    %92 = arith.addf %78, %87 : vector<16x64xf32>
    %93 = arith.addf %92, %91 : vector<16x64xf32>
    %cst_34 = arith.constant dense<0.000000e+00> : vector<64xf32>
    %94 = vector.multi_reduction <add>, %93, %cst_34 [0] : vector<16x64xf32> to vector<64xf32>
    %95 = vector.shape_cast %94 : vector<64xf32> to vector<1x64xf32>
    %96 = vector.extract_strided_slice %95 {offsets = [0, 0], sizes = [1, 32], strides = [1, 1]} : vector<1x64xf32> to vector<1x32xf32>
    %97 = vector.extract_strided_slice %95 {offsets = [0, 32], sizes = [1, 32], strides = [1, 1]} : vector<1x64xf32> to vector<1x32xf32>
    %98 = arith.addf %96, %97 : vector<1x32xf32>
    %cst_35 = arith.constant 3.125000e-02 : f32
    %99 = vector.broadcast %cst_35 : f32 to vector<1x32xf32>
    %100 = arith.mulf %98, %99 : vector<1x32xf32>
    %101 = tpu.concatenate %100, %100 in 1 : vector<1x32xf32>, vector<1x32xf32> -> vector<1x64xf32>
    %102 = vector.broadcast %101 : vector<1x64xf32> to vector<16x64xf32>
    %103 = arith.subf %93, %102 : vector<16x64xf32>
    %104 = arith.mulf %103, %103 : vector<16x64xf32>
    %cst_36 = arith.constant dense<0.000000e+00> : vector<64xf32>
    %105 = vector.multi_reduction <add>, %104, %cst_36 [0] : vector<16x64xf32> to vector<64xf32>
    %106 = vector.shape_cast %105 : vector<64xf32> to vector<1x64xf32>
    %107 = vector.extract_strided_slice %106 {offsets = [0, 0], sizes = [1, 32], strides = [1, 1]} : vector<1x64xf32> to vector<1x32xf32>
    %108 = vector.extract_strided_slice %106 {offsets = [0, 32], sizes = [1, 32], strides = [1, 1]} : vector<1x64xf32> to vector<1x32xf32>
    %109 = arith.addf %107, %108 : vector<1x32xf32>
    %cst_37 = arith.constant 3.125000e-02 : f32
    %110 = vector.broadcast %cst_37 : f32 to vector<1x32xf32>
    %111 = arith.mulf %109, %110 : vector<1x32xf32>
    %c0_38 = arith.constant 0 : index
    %c0_39 = arith.constant 0 : index
    %112 = vector.load %arg9[%c0_38, %c0_39] : memref<1x32xf32, #tpu.memory_space<vmem>>, vector<1x32xf32>
    %cst_40 = arith.constant 9.99999974E-6 : f32
    %113 = vector.broadcast %cst_40 : f32 to vector<1x32xf32>
    %114 = arith.addf %111, %113 : vector<1x32xf32>
    %115 = math.rsqrt %114 : vector<1x32xf32>
    %116 = arith.mulf %112, %115 : vector<1x32xf32>
    %117 = tpu.concatenate %116, %116 in 1 : vector<1x32xf32>, vector<1x32xf32> -> vector<1x64xf32>
    %c0_41 = arith.constant 0 : index
    %c0_42 = arith.constant 0 : index
    %118 = vector.load %arg10[%c0_41, %c0_42] : memref<1x32xf32, #tpu.memory_space<vmem>>, vector<1x32xf32>
    %119 = tpu.concatenate %118, %118 in 1 : vector<1x32xf32>, vector<1x32xf32> -> vector<1x64xf32>
    %120 = vector.broadcast %117 : vector<1x64xf32> to vector<16x64xf32>
    %121 = arith.mulf %103, %120 : vector<16x64xf32>
    %122 = vector.broadcast %119 : vector<1x64xf32> to vector<16x64xf32>
    %123 = arith.addf %121, %122 : vector<16x64xf32>
    %cst_43 = arith.constant 0.000000e+00 : f32
    %124 = vector.broadcast %cst_43 : f32 to vector<16x64xf32>
    %125 = arith.maximumf %123, %124 : vector<16x64xf32>
    %126 = arith.truncf %125 : vector<16x64xf32> to vector<16x64xbf16>
    %c0_44 = arith.constant 0 : index
    %c0_45 = arith.constant 0 : index
    %127 = vector.load %arg12[%c0_44, %c0_45] : memref<64x128xbf16, #tpu.memory_space<vmem>>, vector<64x128xbf16>
    %cst_46 = arith.constant dense<0.000000e+00> : vector<16x128xf32>
    %128 = tpu.matmul %126, %127, %cst_46 {dimension_numbers = #tpu.dot_dimension_numbers<[1], [0], [0], [1], [0, 0, 1, 1], [], []>} : vector<16x64xbf16>, vector<64x128xbf16>, vector<16x128xf32> -> vector<16x128xf32>
    %c0_47 = arith.constant 0 : index
    %c0_48 = arith.constant 0 : index
    %129 = vector.load %arg11[%c0_47, %c0_48] : memref<64x128xbf16, #tpu.memory_space<vmem>>, vector<64x128xbf16>
    %cst_49 = arith.constant dense<0.000000e+00> : vector<16x128xf32>
    %130 = tpu.matmul %126, %129, %cst_49 {dimension_numbers = #tpu.dot_dimension_numbers<[1], [0], [0], [1], [0, 0, 1, 1], [], []>} : vector<16x64xbf16>, vector<64x128xbf16>, vector<16x128xf32> -> vector<16x128xf32>
    %c0_50 = arith.constant 0 : index
    %c0_51 = arith.constant 0 : index
    %131 = vector.load %arg13[%c0_50, %c0_51] : memref<64x128xbf16, #tpu.memory_space<vmem>>, vector<64x128xbf16>
    %cst_52 = arith.constant dense<0.000000e+00> : vector<16x128xf32>
    %132 = tpu.matmul %126, %131, %cst_52 {dimension_numbers = #tpu.dot_dimension_numbers<[1], [0], [0], [1], [0, 0, 1, 1], [], []>} : vector<16x64xbf16>, vector<64x128xbf16>, vector<16x128xf32> -> vector<16x128xf32>
    %cst_53 = arith.constant 0.000000e+00 : f32
    %133 = vector.broadcast %cst_53 : f32 to vector<1x128xf32>
    %134 = vector.extract_strided_slice %130 {offsets = [1, 0], sizes = [15, 128], strides = [1, 1]} : vector<16x128xf32> to vector<15x128xf32>
    %135 = tpu.concatenate %134, %133 in 0 : vector<15x128xf32>, vector<1x128xf32> -> vector<16x128xf32>
    %136 = vector.broadcast %25 : vector<16x1xf32> to vector<16x128xf32>
    %137 = arith.mulf %135, %136 : vector<16x128xf32>
    %138 = vector.extract_strided_slice %132 {offsets = [0, 0], sizes = [15, 128], strides = [1, 1]} : vector<16x128xf32> to vector<15x128xf32>
    %139 = tpu.concatenate %133, %138 in 0 : vector<1x128xf32>, vector<15x128xf32> -> vector<16x128xf32>
    %140 = vector.broadcast %21 : vector<16x1xf32> to vector<16x128xf32>
    %141 = arith.mulf %139, %140 : vector<16x128xf32>
    %142 = arith.addf %128, %137 : vector<16x128xf32>
    %143 = arith.addf %142, %141 : vector<16x128xf32>
    %cst_54 = arith.constant dense<0.000000e+00> : vector<128xf32>
    %144 = vector.multi_reduction <add>, %143, %cst_54 [0] : vector<16x128xf32> to vector<128xf32>
    %145 = vector.shape_cast %144 : vector<128xf32> to vector<1x128xf32>
    %146 = vector.extract_strided_slice %145 {offsets = [0, 0], sizes = [1, 32], strides = [1, 1]} : vector<1x128xf32> to vector<1x32xf32>
    %147 = vector.extract_strided_slice %145 {offsets = [0, 32], sizes = [1, 32], strides = [1, 1]} : vector<1x128xf32> to vector<1x32xf32>
    %148 = arith.addf %146, %147 : vector<1x32xf32>
    %149 = vector.extract_strided_slice %145 {offsets = [0, 64], sizes = [1, 32], strides = [1, 1]} : vector<1x128xf32> to vector<1x32xf32>
    %150 = arith.addf %148, %149 : vector<1x32xf32>
    %151 = vector.extract_strided_slice %145 {offsets = [0, 96], sizes = [1, 32], strides = [1, 1]} : vector<1x128xf32> to vector<1x32xf32>
    %152 = arith.addf %150, %151 : vector<1x32xf32>
    %cst_55 = arith.constant 1.562500e-02 : f32
    %153 = vector.broadcast %cst_55 : f32 to vector<1x32xf32>
    %154 = arith.mulf %152, %153 : vector<1x32xf32>
    %155 = tpu.concatenate %154, %154, %154, %154 in 1 : vector<1x32xf32>, vector<1x32xf32>, vector<1x32xf32>, vector<1x32xf32> -> vector<1x128xf32>
    %156 = vector.broadcast %155 : vector<1x128xf32> to vector<16x128xf32>
    %157 = arith.subf %143, %156 : vector<16x128xf32>
    %158 = arith.mulf %157, %157 : vector<16x128xf32>
    %cst_56 = arith.constant dense<0.000000e+00> : vector<128xf32>
    %159 = vector.multi_reduction <add>, %158, %cst_56 [0] : vector<16x128xf32> to vector<128xf32>
    %160 = vector.shape_cast %159 : vector<128xf32> to vector<1x128xf32>
    %161 = vector.extract_strided_slice %160 {offsets = [0, 0], sizes = [1, 32], strides = [1, 1]} : vector<1x128xf32> to vector<1x32xf32>
    %162 = vector.extract_strided_slice %160 {offsets = [0, 32], sizes = [1, 32], strides = [1, 1]} : vector<1x128xf32> to vector<1x32xf32>
    %163 = arith.addf %161, %162 : vector<1x32xf32>
    %164 = vector.extract_strided_slice %160 {offsets = [0, 64], sizes = [1, 32], strides = [1, 1]} : vector<1x128xf32> to vector<1x32xf32>
    %165 = arith.addf %163, %164 : vector<1x32xf32>
    %166 = vector.extract_strided_slice %160 {offsets = [0, 96], sizes = [1, 32], strides = [1, 1]} : vector<1x128xf32> to vector<1x32xf32>
    %167 = arith.addf %165, %166 : vector<1x32xf32>
    %cst_57 = arith.constant 1.562500e-02 : f32
    %168 = vector.broadcast %cst_57 : f32 to vector<1x32xf32>
    %169 = arith.mulf %167, %168 : vector<1x32xf32>
    %c0_58 = arith.constant 0 : index
    %c0_59 = arith.constant 0 : index
    %170 = vector.load %arg14[%c0_58, %c0_59] : memref<1x32xf32, #tpu.memory_space<vmem>>, vector<1x32xf32>
    %cst_60 = arith.constant 9.99999974E-6 : f32
    %171 = vector.broadcast %cst_60 : f32 to vector<1x32xf32>
    %172 = arith.addf %169, %171 : vector<1x32xf32>
    %173 = math.rsqrt %172 : vector<1x32xf32>
    %174 = arith.mulf %170, %173 : vector<1x32xf32>
    %175 = tpu.concatenate %174, %174, %174, %174 in 1 : vector<1x32xf32>, vector<1x32xf32>, vector<1x32xf32>, vector<1x32xf32> -> vector<1x128xf32>
    %c0_61 = arith.constant 0 : index
    %c0_62 = arith.constant 0 : index
    %176 = vector.load %arg15[%c0_61, %c0_62] : memref<1x32xf32, #tpu.memory_space<vmem>>, vector<1x32xf32>
    %177 = tpu.concatenate %176, %176, %176, %176 in 1 : vector<1x32xf32>, vector<1x32xf32>, vector<1x32xf32>, vector<1x32xf32> -> vector<1x128xf32>
    %178 = vector.broadcast %175 : vector<1x128xf32> to vector<16x128xf32>
    %179 = arith.mulf %157, %178 : vector<16x128xf32>
    %180 = vector.broadcast %177 : vector<1x128xf32> to vector<16x128xf32>
    %181 = arith.addf %179, %180 : vector<16x128xf32>
    %cst_63 = arith.constant 0.000000e+00 : f32
    %182 = vector.broadcast %cst_63 : f32 to vector<16x128xf32>
    %183 = arith.maximumf %181, %182 : vector<16x128xf32>
    %184 = arith.truncf %183 : vector<16x128xf32> to vector<16x128xbf16>
    %c0_64 = arith.constant 0 : index
    %c0_65 = arith.constant 0 : index
    %185 = vector.load %arg17[%c0_64, %c0_65] : memref<128x4xbf16, #tpu.memory_space<vmem>>, vector<128x4xbf16>
    %cst_66 = arith.constant dense<0.000000e+00> : vector<16x4xf32>
    %186 = tpu.matmul %184, %185, %cst_66 {dimension_numbers = #tpu.dot_dimension_numbers<[1], [0], [0], [1], [0, 0, 1, 1], [], []>} : vector<16x128xbf16>, vector<128x4xbf16>, vector<16x4xf32> -> vector<16x4xf32>
    %c0_67 = arith.constant 0 : index
    %c0_68 = arith.constant 0 : index
    %187 = vector.load %arg16[%c0_67, %c0_68] : memref<128x4xbf16, #tpu.memory_space<vmem>>, vector<128x4xbf16>
    %cst_69 = arith.constant dense<0.000000e+00> : vector<16x4xf32>
    %188 = tpu.matmul %184, %187, %cst_69 {dimension_numbers = #tpu.dot_dimension_numbers<[1], [0], [0], [1], [0, 0, 1, 1], [], []>} : vector<16x128xbf16>, vector<128x4xbf16>, vector<16x4xf32> -> vector<16x4xf32>
    %c0_70 = arith.constant 0 : index
    %c0_71 = arith.constant 0 : index
    %189 = vector.load %arg18[%c0_70, %c0_71] : memref<128x4xbf16, #tpu.memory_space<vmem>>, vector<128x4xbf16>
    %cst_72 = arith.constant dense<0.000000e+00> : vector<16x4xf32>
    %190 = tpu.matmul %184, %189, %cst_72 {dimension_numbers = #tpu.dot_dimension_numbers<[1], [0], [0], [1], [0, 0, 1, 1], [], []>} : vector<16x128xbf16>, vector<128x4xbf16>, vector<16x4xf32> -> vector<16x4xf32>
    %cst_73 = arith.constant 0.000000e+00 : f32
    %191 = vector.broadcast %cst_73 : f32 to vector<1x4xf32>
    %192 = vector.extract_strided_slice %188 {offsets = [1, 0], sizes = [15, 4], strides = [1, 1]} : vector<16x4xf32> to vector<15x4xf32>
    %193 = tpu.concatenate %192, %191 in 0 : vector<15x4xf32>, vector<1x4xf32> -> vector<16x4xf32>
    %194 = vector.broadcast %25 : vector<16x1xf32> to vector<16x4xf32>
    %195 = arith.mulf %193, %194 : vector<16x4xf32>
    %196 = vector.extract_strided_slice %190 {offsets = [0, 0], sizes = [15, 4], strides = [1, 1]} : vector<16x4xf32> to vector<15x4xf32>
    %197 = tpu.concatenate %191, %196 in 0 : vector<1x4xf32>, vector<15x4xf32> -> vector<16x4xf32>
    %198 = vector.broadcast %21 : vector<16x1xf32> to vector<16x4xf32>
    %199 = arith.mulf %197, %198 : vector<16x4xf32>
    %200 = arith.addf %186, %195 : vector<16x4xf32>
    %201 = arith.addf %200, %199 : vector<16x4xf32>
    %cst_74 = arith.constant dense<0.000000e+00> : vector<4xf32>
    %202 = vector.multi_reduction <add>, %201, %cst_74 [0] : vector<16x4xf32> to vector<4xf32>
    %203 = vector.shape_cast %202 : vector<4xf32> to vector<1x4xf32>
    %204 = vector.extract_strided_slice %203 {offsets = [0, 0], sizes = [1, 1], strides = [1, 1]} : vector<1x4xf32> to vector<1x1xf32>
    %205 = vector.extract_strided_slice %203 {offsets = [0, 1], sizes = [1, 1], strides = [1, 1]} : vector<1x4xf32> to vector<1x1xf32>
    %206 = arith.addf %204, %205 : vector<1x1xf32>
    %207 = vector.extract_strided_slice %203 {offsets = [0, 2], sizes = [1, 1], strides = [1, 1]} : vector<1x4xf32> to vector<1x1xf32>
    %208 = arith.addf %206, %207 : vector<1x1xf32>
    %209 = vector.extract_strided_slice %203 {offsets = [0, 3], sizes = [1, 1], strides = [1, 1]} : vector<1x4xf32> to vector<1x1xf32>
    %210 = arith.addf %208, %209 : vector<1x1xf32>
    %cst_75 = arith.constant 1.562500e-02 : f32
    %211 = vector.broadcast %cst_75 : f32 to vector<1x1xf32>
    %212 = arith.mulf %210, %211 : vector<1x1xf32>
    %213 = tpu.concatenate %212, %212, %212, %212 in 1 : vector<1x1xf32>, vector<1x1xf32>, vector<1x1xf32>, vector<1x1xf32> -> vector<1x4xf32>
    %214 = vector.broadcast %213 : vector<1x4xf32> to vector<16x4xf32>
    %215 = arith.subf %201, %214 : vector<16x4xf32>
    %216 = arith.mulf %215, %215 : vector<16x4xf32>
    %cst_76 = arith.constant dense<0.000000e+00> : vector<4xf32>
    %217 = vector.multi_reduction <add>, %216, %cst_76 [0] : vector<16x4xf32> to vector<4xf32>
    %218 = vector.shape_cast %217 : vector<4xf32> to vector<1x4xf32>
    %219 = vector.extract_strided_slice %218 {offsets = [0, 0], sizes = [1, 1], strides = [1, 1]} : vector<1x4xf32> to vector<1x1xf32>
    %220 = vector.extract_strided_slice %218 {offsets = [0, 1], sizes = [1, 1], strides = [1, 1]} : vector<1x4xf32> to vector<1x1xf32>
    %221 = arith.addf %219, %220 : vector<1x1xf32>
    %222 = vector.extract_strided_slice %218 {offsets = [0, 2], sizes = [1, 1], strides = [1, 1]} : vector<1x4xf32> to vector<1x1xf32>
    %223 = arith.addf %221, %222 : vector<1x1xf32>
    %224 = vector.extract_strided_slice %218 {offsets = [0, 3], sizes = [1, 1], strides = [1, 1]} : vector<1x4xf32> to vector<1x1xf32>
    %225 = arith.addf %223, %224 : vector<1x1xf32>
    %cst_77 = arith.constant 1.562500e-02 : f32
    %226 = vector.broadcast %cst_77 : f32 to vector<1x1xf32>
    %227 = arith.mulf %225, %226 : vector<1x1xf32>
    %c0_78 = arith.constant 0 : index
    %c0_79 = arith.constant 0 : index
    %228 = vector.load %arg19[%c0_78, %c0_79] : memref<1x1xf32, #tpu.memory_space<vmem>>, vector<1x1xf32>
    %cst_80 = arith.constant 9.99999974E-6 : f32
    %229 = vector.broadcast %cst_80 : f32 to vector<1x1xf32>
    %230 = arith.addf %227, %229 : vector<1x1xf32>
    %231 = math.rsqrt %230 : vector<1x1xf32>
    %232 = arith.mulf %228, %231 : vector<1x1xf32>
    %233 = tpu.concatenate %232, %232, %232, %232 in 1 : vector<1x1xf32>, vector<1x1xf32>, vector<1x1xf32>, vector<1x1xf32> -> vector<1x4xf32>
    %c0_81 = arith.constant 0 : index
    %c0_82 = arith.constant 0 : index
    %234 = vector.load %arg20[%c0_81, %c0_82] : memref<1x1xf32, #tpu.memory_space<vmem>>, vector<1x1xf32>
    %235 = tpu.concatenate %234, %234, %234, %234 in 1 : vector<1x1xf32>, vector<1x1xf32>, vector<1x1xf32>, vector<1x1xf32> -> vector<1x4xf32>
    %236 = vector.broadcast %233 : vector<1x4xf32> to vector<16x4xf32>
    %237 = arith.mulf %215, %236 : vector<16x4xf32>
    %238 = vector.broadcast %235 : vector<1x4xf32> to vector<16x4xf32>
    %239 = arith.addf %237, %238 : vector<16x4xf32>
    %cst_83 = arith.constant 0.000000e+00 : f32
    %240 = vector.broadcast %cst_83 : f32 to vector<16x4xf32>
    %241 = arith.maximumf %239, %240 : vector<16x4xf32>
    %c0_84 = arith.constant 0 : index
    %c0_85 = arith.constant 0 : index
    %242 = vector.load %arg21[%c0_84, %c0_85] : memref<16x4xf32, #tpu.memory_space<vmem>>, vector<16x4xf32>
    tpu.vector_store %arg21[%c0_84, %c0_85], %241 {strides = array<i32>} : memref<16x4xf32, #tpu.memory_space<vmem>>, vector<16x4xf32>,
    return
  }
}

</mosaic_0001>

<llo_original>
// kernel: tpu_custom_call.1
$region0: #{tpu_custom_call.1}
  #allocation0 [shape = 'u32[]', space=smem, size = 0x4, offset = 0x4, fixed_abs, tag = 'smem constant byte address 0x4 - core index']
  #allocation1 [shape = 'u32[144,128]{1,0:T(1,128)}', space=vmem, size = 0x12000, scoped, tag = 'internal scratch']
  #allocation2 [shape = 'f32[1,1]{1,0:T(1,128)S(1)}', space=vmem, size = 0x200, scoped, tag = 'scoped memory for tpu_custom_call.1']
  #allocation3 [shape = 'f32[1,1]{1,0:T(1,128)S(1)}', space=vmem, size = 0x200, scoped, tag = 'scoped memory for tpu_custom_call.1']
  %s0 = inlined_call_operand.vmem [shape: f32[16,8], index: 0, kind: input, shape index: {}]
  %s1 = inlined_call_operand.vmem [shape: bf16[8,64], index: 1, kind: input, shape index: {}]
  %s2 = inlined_call_operand.vmem [shape: bf16[8,64], index: 2, kind: input, shape index: {}]
  %s3 = inlined_call_operand.vmem [shape: bf16[8,64], index: 3, kind: input, shape index: {}]
  %s4 = inlined_call_operand.vmem [shape: f32[1,32], index: 4, kind: input, shape index: {}]
  %s5 = inlined_call_operand.vmem [shape: f32[1,32], index: 5, kind: input, shape index: {}]
  %s6 = inlined_call_operand.vmem [shape: bf16[64,64], index: 6, kind: input, shape index: {}]
  %s7 = inlined_call_operand.vmem [shape: bf16[64,64], index: 7, kind: input, shape index: {}]
  %s8 = inlined_call_operand.vmem [shape: bf16[64,64], index: 8, kind: input, shape index: {}]
  %s9 = inlined_call_operand.vmem [shape: f32[1,32], index: 9, kind: input, shape index: {}]
  %s10 = inlined_call_operand.vmem [shape: f32[1,32], index: 10, kind: input, shape index: {}]
  %s11 = inlined_call_operand.vmem [shape: bf16[64,128], index: 11, kind: input, shape index: {}]
  %s12 = inlined_call_operand.vmem [shape: bf16[64,128], index: 12, kind: input, shape index: {}]
  %s13 = inlined_call_operand.vmem [shape: bf16[64,128], index: 13, kind: input, shape index: {}]
  %s14 = inlined_call_operand.vmem [shape: f32[1,32], index: 14, kind: input, shape index: {}]
  %s15 = inlined_call_operand.vmem [shape: f32[1,32], index: 15, kind: input, shape index: {}]
  %s16 = inlined_call_operand.vmem [shape: bf16[128,4], index: 16, kind: input, shape index: {}]
  %s17 = inlined_call_operand.vmem [shape: bf16[128,4], index: 17, kind: input, shape index: {}]
  %s18 = inlined_call_operand.vmem [shape: bf16[128,4], index: 18, kind: input, shape index: {}]
  %s19 = inlined_call_operand.<no memory space> [shape: f32[1,1], index: 19, kind: input, shape index: {}]
  %s20 = inlined_call_operand.<no memory space> [shape: f32[1,1], index: 20, kind: input, shape index: {}]
  %s21 = inlined_call_operand.vmem [shape: f32[16,4], index: 21, kind: output, shape index: {}]
  %s22 = sld [smem:[#allocation0]]
  $region94: #{tpu_custom_call.1} parent=0
    _
  %s24 = ssub.s32 1, %s22
  %s25 = scalar_select 0, %s24, %s22
  %v26 = vstv %s19
  %27 = vst [vmem:[#allocation2] sm:$0x1] %v26
  %v28 = vstv %s20
  %29 = vst [vmem:[#allocation3] sm:$0x1] %v28
  // Predicated region
  $region2: #{tpu_custom_call.1} parent=0 // pred_check
    _
  $region3: #{tpu_custom_call.1} parent=0 // pred_check_branch
    %31 = sbr.rel (0) target = $region5
  $region4: #{tpu_custom_call.1} parent=0 // pred_region
    _
  $region5: #{tpu_custom_call.1} parent=0 // pred_fallthru
    _
  // Predicated region
  $region6: #{tpu_custom_call.1} parent=0 // pred_check
    _
  $region7: #{tpu_custom_call.1} parent=0 // pred_check_branch
    %33 = sbr.rel (0) target = $region9
  $region8: #{tpu_custom_call.1} parent=0 // pred_region
    _
  $region9: #{tpu_custom_call.1} parent=0 // pred_fallthru
    _
  // Predicated region
  $region10: #{tpu_custom_call.1} parent=0 // pred_check
    _
  $region11: #{tpu_custom_call.1} parent=0 // pred_check_branch
    %35 = sbr.rel (0) target = $region13
  $region12: #{tpu_custom_call.1} parent=0 // pred_region
    _
  $region13: #{tpu_custom_call.1} parent=0 // pred_fallthru
    _
  // Predicated region
  $region14: #{tpu_custom_call.1} parent=0 // pred_check
    _
  $region15: #{tpu_custom_call.1} parent=0 // pred_check_branch
    %37 = sbr.rel (0) target = $region17
  $region16: #{tpu_custom_call.1} parent=0 // pred_region
    _
  $region17: #{tpu_custom_call.1} parent=0 // pred_fallthru
    _
  // Predicated region
  $region18: #{tpu_custom_call.1} parent=0 // pred_check
    _
  $region19: #{tpu_custom_call.1} parent=0 // pred_check_branch
    %39 = sbr.rel (0) target = $region21
  $region20: #{tpu_custom_call.1} parent=0 // pred_region
    _
  $region21: #{tpu_custom_call.1} parent=0 // pred_fallthru
    _
  // Predicated region
  $region22: #{tpu_custom_call.1} parent=0 // pred_check
    _
  $region23: #{tpu_custom_call.1} parent=0 // pred_check_branch
    %41 = sbr.rel (0) target = $region25
  $region24: #{tpu_custom_call.1} parent=0 // pred_region
    _
  $region25: #{tpu_custom_call.1} parent=0 // pred_fallthru
    _
  // Predicated region
  $region26: #{tpu_custom_call.1} parent=0 // pred_check
    _
  $region27: #{tpu_custom_call.1} parent=0 // pred_check_branch
    %43 = sbr.rel (0) target = $region29
  $region28: #{tpu_custom_call.1} parent=0 // pred_region
    _
  $region29: #{tpu_custom_call.1} parent=0 // pred_fallthru
    _
  // Predicated region
  $region30: #{tpu_custom_call.1} parent=0 // pred_check
    _
  $region31: #{tpu_custom_call.1} parent=0 // pred_check_branch
    %45 = sbr.rel (0) target = $region33
  $region32: #{tpu_custom_call.1} parent=0 // pred_region
    _
  $region33: #{tpu_custom_call.1} parent=0 // pred_fallthru
    _
  // Predicated region
  $region34: #{tpu_custom_call.1} parent=0 // pred_check
    _
  $region35: #{tpu_custom_call.1} parent=0 // pred_check_branch
    %47 = sbr.rel (0) target = $region37
  $region36: #{tpu_custom_call.1} parent=0 // pred_region
    _
  $region37: #{tpu_custom_call.1} parent=0 // pred_fallthru
    _
  // Predicated region
  $region38: #{tpu_custom_call.1} parent=0 // pred_check
    _
  $region39: #{tpu_custom_call.1} parent=0 // pred_check_branch
    %49 = sbr.rel (0) target = $region41
  $region40: #{tpu_custom_call.1} parent=0 // pred_region
    _
  $region41: #{tpu_custom_call.1} parent=0 // pred_fallthru
    _
  // Predicated region
  $region42: #{tpu_custom_call.1} parent=0 // pred_check
    _
  $region43: #{tpu_custom_call.1} parent=0 // pred_check_branch
    %51 = sbr.rel (0) target = $region45
  $region44: #{tpu_custom_call.1} parent=0 // pred_region
    _
  $region45: #{tpu_custom_call.1} parent=0 // pred_fallthru
    _
  // Predicated region
  $region46: #{tpu_custom_call.1} parent=0 // pred_check
    _
  $region47: #{tpu_custom_call.1} parent=0 // pred_check_branch
    %53 = sbr.rel (0) target = $region49
  $region48: #{tpu_custom_call.1} parent=0 // pred_region
    _
  $region49: #{tpu_custom_call.1} parent=0 // pred_fallthru
    _
  // Predicated region
  $region50: #{tpu_custom_call.1} parent=0 // pred_check
    _
  $region51: #{tpu_custom_call.1} parent=0 // pred_check_branch
    %55 = sbr.rel (0) target = $region53
  $region52: #{tpu_custom_call.1} parent=0 // pred_region
    _
  $region53: #{tpu_custom_call.1} parent=0 // pred_fallthru
    _
  // Predicated region
  $region54: #{tpu_custom_call.1} parent=0 // pred_check
    _
  $region55: #{tpu_custom_call.1} parent=0 // pred_check_branch
    %57 = sbr.rel (0) target = $region57
  $region56: #{tpu_custom_call.1} parent=0 // pred_region
    _
  $region57: #{tpu_custom_call.1} parent=0 // pred_fallthru
    _
  // Predicated region
  $region58: #{tpu_custom_call.1} parent=0 // pred_check
    _
  $region59: #{tpu_custom_call.1} parent=0 // pred_check_branch
    %59 = sbr.rel (0) target = $region61
  $region60: #{tpu_custom_call.1} parent=0 // pred_region
    _
  $region61: #{tpu_custom_call.1} parent=0 // pred_fallthru
    _
  // Predicated region
  $region62: #{tpu_custom_call.1} parent=0 // pred_check
    _
  $region63: #{tpu_custom_call.1} parent=0 // pred_check_branch
    %61 = sbr.rel (0) target = $region65
  $region64: #{tpu_custom_call.1} parent=0 // pred_region
    _
  $region65: #{tpu_custom_call.1} parent=0 // pred_fallthru
    _
  // Predicated region
  $region66: #{tpu_custom_call.1} parent=0 // pred_check
    _
  $region67: #{tpu_custom_call.1} parent=0 // pred_check_branch
    %63 = sbr.rel (0) target = $region69
  $region68: #{tpu_custom_call.1} parent=0 // pred_region
    _
  $region69: #{tpu_custom_call.1} parent=0 // pred_fallthru
    _
  // Predicated region
  $region70: #{tpu_custom_call.1} parent=0 // pred_check
    _
  $region71: #{tpu_custom_call.1} parent=0 // pred_check_branch
    %65 = sbr.rel (0) target = $region73
  $region72: #{tpu_custom_call.1} parent=0 // pred_region
    _
  $region73: #{tpu_custom_call.1} parent=0 // pred_fallthru
    _
  // Predicated region
  $region74: #{tpu_custom_call.1} parent=0 // pred_check
    _
  $region75: #{tpu_custom_call.1} parent=0 // pred_check_branch
    %67 = sbr.rel (0) target = $region77
  $region76: #{tpu_custom_call.1} parent=0 // pred_region
    _
  $region77: #{tpu_custom_call.1} parent=0 // pred_fallthru
    _
  // Predicated region
  $region78: #{tpu_custom_call.1} parent=0 // pred_check
    _
  $region79: #{tpu_custom_call.1} parent=0 // pred_check_branch
    %69 = sbr.rel (0) target = $region81
  $region80: #{tpu_custom_call.1} parent=0 // pred_region
    _
  $region81: #{tpu_custom_call.1} parent=0 // pred_fallthru
    _
  // Predicated region
  $region82: #{tpu_custom_call.1} parent=0 // pred_check
    _
  $region83: #{tpu_custom_call.1} parent=0 // pred_check_branch
    %71 = sbr.rel (0) target = $region85
  $region84: #{tpu_custom_call.1} parent=0 // pred_region
    _
  $region85: #{tpu_custom_call.1} parent=0 // pred_fallthru
    _
  %v73 = vld [vmem:[%s0] sm:$0xff]
  %v74 = vld [vmem:[%s0 + $0x8] sm:$0xff]
  %v75 = vlaneseq
  %v76 = vshrl.u32 %v75, 7
  %v77 = vadd.s32 %v76, 8
  %vm78 = vcmp.lt.s32.totalorder %v76, 0
  %v79 = vsub.s32 0, %v76
  %v80 = vsel %vm78, %v79, %v76
  %v81 = vshrl.u32 %v80, 3
  %v82 = vand.u32 %v80, 7
  %v83 = vsub.s32 0, %v82
  %v84 = vsel %vm78, %v83, %v82
  %vm85 = vcmp.lt.s32.totalorder %v77, 0
  %v86 = vsub.s32 0, %v77
  %v87 = vsel %vm85, %v86, %v77
  %v88 = vshrl.u32 %v87, 3
  %v89 = vand.u32 %v87, 7
  %v90 = vsub.s32 0, %v89
  %v91 = vsel %vm85, %v90, %v89
  %vm92 = vcmp.ne.s32.totalorder %v84, 0
  %vm93 = vcmp.ne.s32.totalorder %v91, 0
  %vm94 = vcmp.lt.s32.totalorder %v84, 0
  %vm95 = vcmp.lt.s32.totalorder %v91, 0
  %vm96 = vmand %vm94, %vm92
  %vm97 = vmand %vm95, %vm93
  %v98 = vadd.s32 %v84, 8
  %v99 = vadd.s32 %v91, 8
  %v100 = vsel %vm96, %v98, %v84
  %v101 = vsel %vm97, %v99, %v91
  %vm102 = vcmp.ne.s32.totalorder %v100, 0
  %vm103 = vcmp.ne.s32.totalorder %v101, 0
  %v104 = vsel %vm102, 1, 0
  %v105 = vsel %vm103, 1, 0
  %v106 = vcvt.s32.f32 %v104
  %v107 = vcvt.s32.f32 %v105
  %vm108 = vcmp.ne.s32.totalorder %v100, 7
  %vm109 = vcmp.ne.s32.totalorder %v101, 7
  %v110 = vsel %vm108, 1, 0
  %v111 = vsel %vm109, 1, 0
  %v112 = vcvt.s32.f32 %v110
  %v113 = vcvt.s32.f32 %v111
  %v114 = vpack.c.bf16 %v74, %v73
  %v115 = vld [vmem:[%s2] sm:$0xf]
  %v116 = vld [vmem:[%s1] sm:$0xf]
  %vm117 = vcmask 64512
  %v119 = vsel %vm117, %v114, 0
  %vm121 = vcmask 1043456
  %v123 = vsel %vm121, %v116, 0
  %125 = vmatprep.subr.bf16.mxu0 0
  %126 = vmatpush1.bf16.msra.mxu0 %v123
  %127 = vmatprep.subr.bf16.mxu0 0
  %128 = vmatpush1.bf16.msra.mxu0 0
  %129 = vmatprep.subr.bf16.mxu0 0
  %130 = vmatpush1.bf16.msra.mxu0 0
  %131 = vmatprep.subr.bf16.mxu0 0
  %132 = vmatpush1.bf16.msra.mxu0 0
  %133 = vmatprep.subr.bf16.mxu0 0
  %134 = vmatpush1.bf16.msra.mxu0 0
  %135 = vmatprep.subr.bf16.mxu0 0
  %136 = vmatpush1.bf16.msra.mxu0 0
  %137 = vmatprep.subr.bf16.mxu0 0
  %138 = vmatpush1.bf16.msra.mxu0 0
  %139 = vmatprep.subr.bf16.mxu0 0
  %140 = vmatpush1.bf16.msra.mxu0 0
  %141 = vmatprep.subr.bf16.mxu0 0
  %142 = vmatpush1.bf16.msra.mxu0 0
  %143 = vmatprep.subr.bf16.mxu0 0
  %144 = vmatpush1.bf16.msra.mxu0 0
  %145 = vmatprep.subr.bf16.mxu0 0
  %146 = vmatpush1.bf16.msra.mxu0 0
  %147 = vmatprep.subr.bf16.mxu0 0
  %148 = vmatpush1.bf16.msra.mxu0 0
  %149 = vmatprep.subr.bf16.mxu0 0
  %150 = vmatpush1.bf16.msra.mxu0 0
  %151 = vmatprep.subr.bf16.mxu0 0
  %152 = vmatpush1.bf16.msra.mxu0 0
  %153 = vmatprep.subr.bf16.mxu0 0
  %154 = vmatpush1.bf16.msra.mxu0 0
  %155 = vmatprep.subr.bf16.mxu0 0
  %156 = vmatpush1.bf16.msra.mxu0 0
  %157 = vmatprep.mubr.bf16.mxu0 0
  %158 = vmatmul.mubr.bf16.gmra.mrb[0].mxu0 %v119
  %v159 = vpop.f32.mrb[0].mxu0
  %v160 = vadd.f32 0.0, %v159
  %v161 = vpop.f32.mrb[0].mxu0
  %v162 = vpop.f32.mrb[0].mxu0
  %v163 = vadd.f32 0.0, %v162
  %v164 = vpop.f32.mrb[0].mxu0
  %165 = vdwg.mxu0
  %v166 = vld [vmem:[%s3] sm:$0xf]
  %v168 = vsel %vm121, %v166, 0
  %170 = vmatprep.subr.bf16.mxu0 0
  %171 = vmatpush1.bf16.msra.mxu0 %v168
  %172 = vmatprep.subr.bf16.mxu0 0
  %173 = vmatpush1.bf16.msra.mxu0 0
  %174 = vmatprep.subr.bf16.mxu0 0
  %175 = vmatpush1.bf16.msra.mxu0 0
  %176 = vmatprep.subr.bf16.mxu0 0
  %177 = vmatpush1.bf16.msra.mxu0 0
  %178 = vmatprep.subr.bf16.mxu0 0
  %179 = vmatpush1.bf16.msra.mxu0 0
  %180 = vmatprep.subr.bf16.mxu0 0
  %181 = vmatpush1.bf16.msra.mxu0 0
  %182 = vmatprep.subr.bf16.mxu0 0
  %183 = vmatpush1.bf16.msra.mxu0 0
  %184 = vmatprep.subr.bf16.mxu0 0
  %185 = vmatpush1.bf16.msra.mxu0 0
  %186 = vmatprep.subr.bf16.mxu0 0
  %187 = vmatpush1.bf16.msra.mxu0 0
  %188 = vmatprep.subr.bf16.mxu0 0
  %189 = vmatpush1.bf16.msra.mxu0 0
  %190 = vmatprep.subr.bf16.mxu0 0
  %191 = vmatpush1.bf16.msra.mxu0 0
  %192 = vmatprep.subr.bf16.mxu0 0
  %193 = vmatpush1.bf16.msra.mxu0 0
  %194 = vmatprep.subr.bf16.mxu0 0
  %195 = vmatpush1.bf16.msra.mxu0 0
  %196 = vmatprep.subr.bf16.mxu0 0
  %197 = vmatpush1.bf16.msra.mxu0 0
  %198 = vmatprep.subr.bf16.mxu0 0
  %199 = vmatpush1.bf16.msra.mxu0 0
  %200 = vmatprep.subr.bf16.mxu0 0
  %201 = vmatpush1.bf16.msra.mxu0 0
  %202 = vmatprep.mubr.bf16.mxu0 0
  %203 = vmatmul.mubr.bf16.gmra.mrb[0].mxu0 %v119
  %v204 = vpop.f32.mrb[0].mxu0
  %v205 = vadd.f32 0.0, %v204
  %v206 = vpop.f32.mrb[0].mxu0
  %v207 = vpop.f32.mrb[0].mxu0
  %v208 = vadd.f32 0.0, %v207
  %v209 = vpop.f32.mrb[0].mxu0
  %210 = vdwg.mxu0
  %vm213 = vcmask 1046528
  %v214 = vrot.slane %v160, 1
  %v215 = vrot.slane %v163, 1
  %v216 = vsel %vm213, %v214, %v215
  %v219 = vsel %vm213, %v215, 0.0
  %v220 = vmul.f32 %v216, %v112
  %v221 = vmul.f32 %v219, %v113
  %vm224 = vcmask 1040384
  %v225 = vrot.slane %v205, 7
  %v226 = vrot.slane %v208, 7
  %v227 = vsel %vm224, %v225, %v226
  %v230 = vsel %vm224, 0.0, %v225
  %v231 = vmul.f32 %v230, %v106
  %v232 = vmul.f32 %v227, %v107
  %v234 = vsel %vm121, %v115, 0
  %236 = vmatprep.subr.bf16.mxu0 0
  %237 = vmatpush1.bf16.msra.mxu0 %v234
  %238 = vmatprep.subr.bf16.mxu0 0
  %239 = vmatpush1.bf16.msra.mxu0 0
  %240 = vmatprep.subr.bf16.mxu0 0
  %241 = vmatpush1.bf16.msra.mxu0 0
  %242 = vmatprep.subr.bf16.mxu0 0
  %243 = vmatpush1.bf16.msra.mxu0 0
  %244 = vmatprep.subr.bf16.mxu0 0
  %245 = vmatpush1.bf16.msra.mxu0 0
  %246 = vmatprep.subr.bf16.mxu0 0
  %247 = vmatpush1.bf16.msra.mxu0 0
  %248 = vmatprep.subr.bf16.mxu0 0
  %249 = vmatpush1.bf16.msra.mxu0 0
  %250 = vmatprep.subr.bf16.mxu0 0
  %251 = vmatpush1.bf16.msra.mxu0 0
  %252 = vmatprep.subr.bf16.mxu0 0
  %253 = vmatpush1.bf16.msra.mxu0 0
  %254 = vmatprep.subr.bf16.mxu0 0
  %255 = vmatpush1.bf16.msra.mxu0 0
  %256 = vmatprep.subr.bf16.mxu0 0
  %257 = vmatpush1.bf16.msra.mxu0 0
  %258 = vmatprep.subr.bf16.mxu0 0
  %259 = vmatpush1.bf16.msra.mxu0 0
  %260 = vmatprep.subr.bf16.mxu0 0
  %261 = vmatpush1.bf16.msra.mxu0 0
  %262 = vmatprep.subr.bf16.mxu0 0
  %263 = vmatpush1.bf16.msra.mxu0 0
  %264 = vmatprep.subr.bf16.mxu0 0
  %265 = vmatpush1.bf16.msra.mxu0 0
  %266 = vmatprep.subr.bf16.mxu0 0
  %267 = vmatpush1.bf16.msra.mxu0 0
  %268 = vmatprep.mubr.bf16.mxu0 0
  %269 = vmatmul.mubr.bf16.gmra.mrb[0].mxu0 %v119
  %v270 = vpop.f32.mrb[0].mxu0
  %v271 = vadd.f32 %v220, %v270
  %v272 = vpop.f32.mrb[0].mxu0
  %v273 = vpop.f32.mrb[0].mxu0
  %v274 = vadd.f32 %v221, %v273
  %v275 = vpop.f32.mrb[0].mxu0
  %276 = vdwg.mxu0
  %v277 = vadd.f32 %v271, %v231
  %v278 = vadd.f32 %v274, %v232
  %vm279 = vcmask 523264
  %v280 = vsel %vm279, %v277, 0.0
  %v281 = vsel %vm279, %v278, 0.0
  %v282 = vadd.f32 %v280, %v281
  %v283 = vrot.slane %v282, 4
  %v284 = vadd.f32 %v282, %v283
  %v285 = vrot.slane %v284, 2
  %v286 = vadd.f32 %v284, %v285
  %v287 = vrot.slane %v286, 1
  %v288 = vadd.f32 %v286, %v287
  %290 = vrot.lane.b32.xlu0 %v288, 96
  %v291 = vpop.permute.xlu0 %290
  %v293 = vadd.f32 %v288, %v291
  %v294 = vmul.f32 %v293, 0.03125
  %296 = vrot.lane.b32.xlu0 %v294, 32
  %v297 = vpop.permute.xlu0 %296
  %vm299 = vcmask 261120
  %v300 = vsel %vm299, %v294, %v297
  %v301 = vlaneseq
  %v302 = vshrl.u32 %v301, 7
  %v303 = vsub.s32 0, %v302
  %v304 = vrot.slane %v300, %v303
  %v305 = vsub.f32 %v277, %v304
  %v306 = vsub.f32 %v278, %v304
  %v307 = vmul.f32 %v305, %v305
  %v308 = vmul.f32 %v306, %v306
  %v309 = vsel %vm279, %v307, 0.0
  %v310 = vsel %vm279, %v308, 0.0
  %v311 = vadd.f32 %v309, %v310
  %v312 = vrot.slane %v311, 4
  %v313 = vadd.f32 %v311, %v312
  %v314 = vrot.slane %v313, 2
  %v315 = vadd.f32 %v313, %v314
  %v316 = vrot.slane %v315, 1
  %v317 = vadd.f32 %v315, %v316
  %319 = vrot.lane.b32.xlu0 %v317, 96
  %v320 = vpop.permute.xlu0 %319
  %v322 = vadd.f32 %v317, %v320
  %v323 = vmul.f32 %v322, 0.03125
  %v324 = vld [vmem:[%s4] sm:$0x1]
  %v325 = vadd.f32 %v323, 1e-05
  %v326 = vrsqrt.pop %v325
  %v327 = vmul.f32 %v324, %v326
  %v329 = vlaneseq
  %v330 = vshrl.u32 %v329, 7
  %v331 = vsub.s32 0, %v330
  %v332 = vrot.slane %v327, %v331
  %333 = vrot.lane.b32.xlu0 %v332, 32
  %v334 = vpop.permute.xlu0 %333
  %v336 = vsel %vm299, %v327, %v334
  %v337 = vld [vmem:[%s5] sm:$0x1]
  %v339 = vlaneseq
  %v340 = vshrl.u32 %v339, 7
  %v341 = vsub.s32 0, %v340
  %v342 = vrot.slane %v337, %v341
  %343 = vrot.lane.b32.xlu0 %v342, 32
  %v344 = vpop.permute.xlu0 %343
  %v346 = vsel %vm299, %v337, %v344
  %v347 = vlaneseq
  %v348 = vshrl.u32 %v347, 7
  %v349 = vsub.s32 0, %v348
  %v350 = vrot.slane %v336, %v349
  %v351 = vmul.f32 %v305, %v350
  %v352 = vmul.f32 %v306, %v350
  %v353 = vlaneseq
  %v354 = vshrl.u32 %v353, 7
  %v355 = vsub.s32 0, %v354
  %v356 = vrot.slane %v346, %v355
  %v357 = vadd.f32 %v351, %v356
  %v358 = vadd.f32 %v352, %v356
  %v359 = vmax.f32 %v357, 0.0
  %v360 = vmax.f32 %v358, 0.0
  %v361 = vpack.c.bf16 %v360, %v359
  %v362 = vld [vmem:[%s7] sm:$0xf]
  %v363 = vld [vmem:[%s7 + $0x4] sm:$0xf]
  %v364 = vld [vmem:[%s7 + $0x8] sm:$0xf]
  %v365 = vld [vmem:[%s7 + $0xc] sm:$0xf]
  %v366 = vld [vmem:[%s7 + $0x10] sm:$0xf]
  %v367 = vld [vmem:[%s7 + $0x14] sm:$0xf]
  %v368 = vld [vmem:[%s7 + $0x18] sm:$0xf]
  %v369 = vld [vmem:[%s7 + $0x1c] sm:$0xf]
  %v370 = vld [vmem:[%s6] sm:$0xf]
  %v371 = vld [vmem:[%s6 + $0x4] sm:$0xf]
  %v372 = vld [vmem:[%s6 + $0x8] sm:$0xf]
  %v373 = vld [vmem:[%s6 + $0xc] sm:$0xf]
  %v374 = vld [vmem:[%s6 + $0x10] sm:$0xf]
  %v375 = vld [vmem:[%s6 + $0x14] sm:$0xf]
  %v376 = vld [vmem:[%s6 + $0x18] sm:$0xf]
  %v377 = vld [vmem:[%s6 + $0x1c] sm:$0xf]
  %v386 = vunpack.c.l.b16 %v370
  %v387 = vunpack.c.l.b16 %v371
  %v388 = vunpack.c.l.b16 %v372
  %v389 = vunpack.c.l.b16 %v373
  %v390 = vunpack.c.l.b16 %v374
  %v391 = vunpack.c.l.b16 %v375
  %v392 = vunpack.c.l.b16 %v376
  %v393 = vunpack.c.l.b16 %v377
  %v394 = vpack.c.b16 %v387, %v386
  %v395 = vpack.c.b16 %v389, %v388
  %v396 = vpack.c.b16 %v391, %v390
  %v397 = vpack.c.b16 %v393, %v392
  %v403 = vsel %vm279, %v361, 0
  %405 = vmatprep.subr.bf16.mxu0 0
  %406 = vmatpush1.bf16.msra.mxu0 %v394
  %407 = vmatprep.subr.bf16.mxu0 0
  %408 = vmatpush1.bf16.msra.mxu0 %v395
  %409 = vmatprep.subr.bf16.mxu0 0
  %410 = vmatpush1.bf16.msra.mxu0 %v396
  %411 = vmatprep.subr.bf16.mxu0 0
  %412 = vmatpush1.bf16.msra.mxu0 %v397
  %413 = vmatprep.subr.bf16.mxu0 0
  %414 = vmatpush1.bf16.msra.mxu0 0
  %415 = vmatprep.subr.bf16.mxu0 0
  %416 = vmatpush1.bf16.msra.mxu0 0
  %417 = vmatprep.subr.bf16.mxu0 0
  %418 = vmatpush1.bf16.msra.mxu0 0
  %419 = vmatprep.subr.bf16.mxu0 0
  %420 = vmatpush1.bf16.msra.mxu0 0
  %421 = vmatprep.subr.bf16.mxu0 0
  %422 = vmatpush1.bf16.msra.mxu0 0
  %423 = vmatprep.subr.bf16.mxu0 0
  %424 = vmatpush1.bf16.msra.mxu0 0
  %425 = vmatprep.subr.bf16.mxu0 0
  %426 = vmatpush1.bf16.msra.mxu0 0
  %427 = vmatprep.subr.bf16.mxu0 0
  %428 = vmatpush1.bf16.msra.mxu0 0
  %429 = vmatprep.subr.bf16.mxu0 0
  %430 = vmatpush1.bf16.msra.mxu0 0
  %431 = vmatprep.subr.bf16.mxu0 0
  %432 = vmatpush1.bf16.msra.mxu0 0
  %433 = vmatprep.subr.bf16.mxu0 0
  %434 = vmatpush1.bf16.msra.mxu0 0
  %435 = vmatprep.subr.bf16.mxu0 0
  %436 = vmatpush1.bf16.msra.mxu0 0
  %437 = vmatprep.mubr.bf16.mxu0 0
  %438 = vmatmul.mubr.bf16.gmra.mrb[0].mxu0 %v403
  %v439 = vpop.f32.mrb[0].mxu0
  %v440 = vadd.f32 0.0, %v439
  %v441 = vpop.f32.mrb[0].mxu0
  %v442 = vpop.f32.mrb[0].mxu0
  %v443 = vadd.f32 0.0, %v442
  %v444 = vpop.f32.mrb[0].mxu0
  %445 = vdwg.mxu0
  %v446 = vld [vmem:[%s8] sm:$0xf]
  %v447 = vld [vmem:[%s8 + $0x4] sm:$0xf]
  %v448 = vld [vmem:[%s8 + $0x8] sm:$0xf]
  %v449 = vld [vmem:[%s8 + $0xc] sm:$0xf]
  %v450 = vld [vmem:[%s8 + $0x10] sm:$0xf]
  %v451 = vld [vmem:[%s8 + $0x14] sm:$0xf]
  %v452 = vld [vmem:[%s8 + $0x18] sm:$0xf]
  %v453 = vld [vmem:[%s8 + $0x1c] sm:$0xf]
  %v462 = vunpack.c.l.b16 %v446
  %v463 = vunpack.c.l.b16 %v447
  %v464 = vunpack.c.l.b16 %v448
  %v465 = vunpack.c.l.b16 %v449
  %v466 = vunpack.c.l.b16 %v450
  %v467 = vunpack.c.l.b16 %v451
  %v468 = vunpack.c.l.b16 %v452
  %v469 = vunpack.c.l.b16 %v453
  %v470 = vpack.c.b16 %v463, %v462
  %v471 = vpack.c.b16 %v465, %v464
  %v472 = vpack.c.b16 %v467, %v466
  %v473 = vpack.c.b16 %v469, %v468
  %478 = vmatprep.subr.bf16.mxu0 0
  %479 = vmatpush1.bf16.msra.mxu0 %v470
  %480 = vmatprep.subr.bf16.mxu0 0
  %481 = vmatpush1.bf16.msra.mxu0 %v471
  %482 = vmatprep.subr.bf16.mxu0 0
  %483 = vmatpush1.bf16.msra.mxu0 %v472
  %484 = vmatprep.subr.bf16.mxu0 0
  %485 = vmatpush1.bf16.msra.mxu0 %v473
  %486 = vmatprep.subr.bf16.mxu0 0
  %487 = vmatpush1.bf16.msra.mxu0 0
  %488 = vmatprep.subr.bf16.mxu0 0
  %489 = vmatpush1.bf16.msra.mxu0 0
  %490 = vmatprep.subr.bf16.mxu0 0
  %491 = vmatpush1.bf16.msra.mxu0 0
  %492 = vmatprep.subr.bf16.mxu0 0
  %493 = vmatpush1.bf16.msra.mxu0 0
  %494 = vmatprep.subr.bf16.mxu0 0
  %495 = vmatpush1.bf16.msra.mxu0 0
  %496 = vmatprep.subr.bf16.mxu0 0
  %497 = vmatpush1.bf16.msra.mxu0 0
  %498 = vmatprep.subr.bf16.mxu0 0
  %499 = vmatpush1.bf16.msra.mxu0 0
  %500 = vmatprep.subr.bf16.mxu0 0
  %501 = vmatpush1.bf16.msra.mxu0 0
  %502 = vmatprep.subr.bf16.mxu0 0
  %503 = vmatpush1.bf16.msra.mxu0 0
  %504 = vmatprep.subr.bf16.mxu0 0
  %505 = vmatpush1.bf16.msra.mxu0 0
  %506 = vmatprep.subr.bf16.mxu0 0
  %507 = vmatpush1.bf16.msra.mxu0 0
  %508 = vmatprep.subr.bf16.mxu0 0
  %509 = vmatpush1.bf16.msra.mxu0 0
  %510 = vmatprep.mubr.bf16.mxu0 0
  %511 = vmatmul.mubr.bf16.gmra.mrb[0].mxu0 %v403
  %v512 = vpop.f32.mrb[0].mxu0
  %v513 = vadd.f32 0.0, %v512
  %v514 = vpop.f32.mrb[0].mxu0
  %v515 = vpop.f32.mrb[0].mxu0
  %v516 = vadd.f32 0.0, %v515
  %v517 = vpop.f32.mrb[0].mxu0
  %518 = vdwg.mxu0
  %v521 = vrot.slane %v440, 1
  %v522 = vrot.slane %v443, 1
  %v523 = vsel %vm213, %v521, %v522
  %v526 = vsel %vm213, %v522, 0.0
  %v527 = vmul.f32 %v523, %v112
  %v528 = vmul.f32 %v526, %v113
  %v531 = vrot.slane %v513, 7
  %v532 = vrot.slane %v516, 7
  %v533 = vsel %vm224, %v531, %v532
  %v536 = vsel %vm224, 0.0, %v531
  %v537 = vmul.f32 %v536, %v106
  %v538 = vmul.f32 %v533, %v107
  %v547 = vunpack.c.l.b16 %v362
  %v548 = vunpack.c.l.b16 %v363
  %v549 = vunpack.c.l.b16 %v364
  %v550 = vunpack.c.l.b16 %v365
  %v551 = vunpack.c.l.b16 %v366
  %v552 = vunpack.c.l.b16 %v367
  %v553 = vunpack.c.l.b16 %v368
  %v554 = vunpack.c.l.b16 %v369
  %v555 = vpack.c.b16 %v548, %v547
  %v556 = vpack.c.b16 %v550, %v549
  %v557 = vpack.c.b16 %v552, %v551
  %v558 = vpack.c.b16 %v554, %v553
  %563 = vmatprep.subr.bf16.mxu0 0
  %564 = vmatpush1.bf16.msra.mxu0 %v555
  %565 = vmatprep.subr.bf16.mxu0 0
  %566 = vmatpush1.bf16.msra.mxu0 %v556
  %567 = vmatprep.subr.bf16.mxu0 0
  %568 = vmatpush1.bf16.msra.mxu0 %v557
  %569 = vmatprep.subr.bf16.mxu0 0
  %570 = vmatpush1.bf16.msra.mxu0 %v558
  %571 = vmatprep.subr.bf16.mxu0 0
  %572 = vmatpush1.bf16.msra.mxu0 0
  %573 = vmatprep.subr.bf16.mxu0 0
  %574 = vmatpush1.bf16.msra.mxu0 0
  %575 = vmatprep.subr.bf16.mxu0 0
  %576 = vmatpush1.bf16.msra.mxu0 0
  %577 = vmatprep.subr.bf16.mxu0 0
  %578 = vmatpush1.bf16.msra.mxu0 0
  %579 = vmatprep.subr.bf16.mxu0 0
  %580 = vmatpush1.bf16.msra.mxu0 0
  %581 = vmatprep.subr.bf16.mxu0 0
  %582 = vmatpush1.bf16.msra.mxu0 0
  %583 = vmatprep.subr.bf16.mxu0 0
  %584 = vmatpush1.bf16.msra.mxu0 0
  %585 = vmatprep.subr.bf16.mxu0 0
  %586 = vmatpush1.bf16.msra.mxu0 0
  %587 = vmatprep.subr.bf16.mxu0 0
  %588 = vmatpush1.bf16.msra.mxu0 0
  %589 = vmatprep.subr.bf16.mxu0 0
  %590 = vmatpush1.bf16.msra.mxu0 0
  %591 = vmatprep.subr.bf16.mxu0 0
  %592 = vmatpush1.bf16.msra.mxu0 0
  %593 = vmatprep.subr.bf16.mxu0 0
  %594 = vmatpush1.bf16.msra.mxu0 0
  %595 = vmatprep.mubr.bf16.mxu0 0
  %596 = vmatmul.mubr.bf16.gmra.mrb[0].mxu0 %v403
  %v597 = vpop.f32.mrb[0].mxu0
  %v598 = vadd.f32 %v527, %v597
  %v599 = vpop.f32.mrb[0].mxu0
  %v600 = vpop.f32.mrb[0].mxu0
  %v601 = vadd.f32 %v528, %v600
  %v602 = vpop.f32.mrb[0].mxu0
  %603 = vdwg.mxu0
  %v604 = vadd.f32 %v598, %v537
  %v605 = vadd.f32 %v601, %v538
  %v606 = vsel %vm279, %v604, 0.0
  %v607 = vsel %vm279, %v605, 0.0
  %v608 = vadd.f32 %v606, %v607
  %v609 = vrot.slane %v608, 4
  %v610 = vadd.f32 %v608, %v609
  %v611 = vrot.slane %v610, 2
  %v612 = vadd.f32 %v610, %v611
  %v613 = vrot.slane %v612, 1
  %v614 = vadd.f32 %v612, %v613
  %616 = vrot.lane.b32.xlu0 %v614, 96
  %v617 = vpop.permute.xlu0 %616
  %v619 = vadd.f32 %v614, %v617
  %v620 = vmul.f32 %v619, 0.03125
  %622 = vrot.lane.b32.xlu0 %v620, 32
  %v623 = vpop.permute.xlu0 %622
  %v625 = vsel %vm299, %v620, %v623
  %v626 = vlaneseq
  %v627 = vshrl.u32 %v626, 7
  %v628 = vsub.s32 0, %v627
  %v629 = vrot.slane %v625, %v628
  %v630 = vsub.f32 %v604, %v629
  %v631 = vsub.f32 %v605, %v629
  %v632 = vmul.f32 %v630, %v630
  %v633 = vmul.f32 %v631, %v631
  %v634 = vsel %vm279, %v632, 0.0
  %v635 = vsel %vm279, %v633, 0.0
  %v636 = vadd.f32 %v634, %v635
  %v637 = vrot.slane %v636, 4
  %v638 = vadd.f32 %v636, %v637
  %v639 = vrot.slane %v638, 2
  %v640 = vadd.f32 %v638, %v639
  %v641 = vrot.slane %v640, 1
  %v642 = vadd.f32 %v640, %v641
  %644 = vrot.lane.b32.xlu0 %v642, 96
  %v645 = vpop.permute.xlu0 %644
  %v647 = vadd.f32 %v642, %v645
  %v648 = vmul.f32 %v647, 0.03125
  %v649 = vld [vmem:[%s9] sm:$0x1]
  %v650 = vadd.f32 %v648, 1e-05
  %v651 = vrsqrt.pop %v650
  %v652 = vmul.f32 %v649, %v651
  %v654 = vlaneseq
  %v655 = vshrl.u32 %v654, 7
  %v656 = vsub.s32 0, %v655
  %v657 = vrot.slane %v652, %v656
  %658 = vrot.lane.b32.xlu0 %v657, 32
  %v659 = vpop.permute.xlu0 %658
  %v661 = vsel %vm299, %v652, %v659
  %v662 = vld [vmem:[%s10] sm:$0x1]
  %v664 = vlaneseq
  %v665 = vshrl.u32 %v664, 7
  %v666 = vsub.s32 0, %v665
  %v667 = vrot.slane %v662, %v666
  %668 = vrot.lane.b32.xlu0 %v667, 32
  %v669 = vpop.permute.xlu0 %668
  %v671 = vsel %vm299, %v662, %v669
  %v672 = vlaneseq
  %v673 = vshrl.u32 %v672, 7
  %v674 = vsub.s32 0, %v673
  %v675 = vrot.slane %v661, %v674
  %v676 = vmul.f32 %v630, %v675
  %v677 = vmul.f32 %v631, %v675
  %v678 = vlaneseq
  %v679 = vshrl.u32 %v678, 7
  %v680 = vsub.s32 0, %v679
  %v681 = vrot.slane %v671, %v680
  %v682 = vadd.f32 %v676, %v681
  %v683 = vadd.f32 %v677, %v681
  %v684 = vmax.f32 %v682, 0.0
  %v685 = vmax.f32 %v683, 0.0
  %v686 = vpack.c.bf16 %v685, %v684
  %v687 = vld [vmem:[%s12] sm:$0xf]
  %v688 = vld [vmem:[%s12 + $0x4] sm:$0xf]
  %v689 = vld [vmem:[%s12 + $0x8] sm:$0xf]
  %v690 = vld [vmem:[%s12 + $0xc] sm:$0xf]
  %v691 = vld [vmem:[%s12 + $0x10] sm:$0xf]
  %v692 = vld [vmem:[%s12 + $0x14] sm:$0xf]
  %v693 = vld [vmem:[%s12 + $0x18] sm:$0xf]
  %v694 = vld [vmem:[%s12 + $0x1c] sm:$0xf]
  %v695 = vld [vmem:[%s11] sm:$0xf]
  %v696 = vld [vmem:[%s11 + $0x4] sm:$0xf]
  %v697 = vld [vmem:[%s11 + $0x8] sm:$0xf]
  %v698 = vld [vmem:[%s11 + $0xc] sm:$0xf]
  %v699 = vld [vmem:[%s11 + $0x10] sm:$0xf]
  %v700 = vld [vmem:[%s11 + $0x14] sm:$0xf]
  %v701 = vld [vmem:[%s11 + $0x18] sm:$0xf]
  %v702 = vld [vmem:[%s11 + $0x1c] sm:$0xf]
  %v711 = vunpack.c.l.b16 %v695
  %v712 = vunpack.c.l.b16 %v696
  %v713 = vunpack.c.l.b16 %v697
  %v714 = vunpack.c.l.b16 %v698
  %v715 = vunpack.c.l.b16 %v699
  %v716 = vunpack.c.l.b16 %v700
  %v717 = vunpack.c.l.b16 %v701
  %v718 = vunpack.c.l.b16 %v702
  %v719 = vpack.c.b16 %v712, %v711
  %v720 = vpack.c.b16 %v714, %v713
  %v721 = vpack.c.b16 %v716, %v715
  %v722 = vpack.c.b16 %v718, %v717
  %v728 = vsel %vm279, %v686, 0
  %730 = vmatprep.subr.bf16.mxu0 0
  %731 = vmatpush1.bf16.msra.mxu0 %v719
  %732 = vmatprep.subr.bf16.mxu0 0
  %733 = vmatpush1.bf16.msra.mxu0 %v720
  %734 = vmatprep.subr.bf16.mxu0 0
  %735 = vmatpush1.bf16.msra.mxu0 %v721
  %736 = vmatprep.subr.bf16.mxu0 0
  %737 = vmatpush1.bf16.msra.mxu0 %v722
  %738 = vmatprep.subr.bf16.mxu0 0
  %739 = vmatpush1.bf16.msra.mxu0 0
  %740 = vmatprep.subr.bf16.mxu0 0
  %741 = vmatpush1.bf16.msra.mxu0 0
  %742 = vmatprep.subr.bf16.mxu0 0
  %743 = vmatpush1.bf16.msra.mxu0 0
  %744 = vmatprep.subr.bf16.mxu0 0
  %745 = vmatpush1.bf16.msra.mxu0 0
  %746 = vmatprep.subr.bf16.mxu0 0
  %747 = vmatpush1.bf16.msra.mxu0 0
  %748 = vmatprep.subr.bf16.mxu0 0
  %749 = vmatpush1.bf16.msra.mxu0 0
  %750 = vmatprep.subr.bf16.mxu0 0
  %751 = vmatpush1.bf16.msra.mxu0 0
  %752 = vmatprep.subr.bf16.mxu0 0
  %753 = vmatpush1.bf16.msra.mxu0 0
  %754 = vmatprep.subr.bf16.mxu0 0
  %755 = vmatpush1.bf16.msra.mxu0 0
  %756 = vmatprep.subr.bf16.mxu0 0
  %757 = vmatpush1.bf16.msra.mxu0 0
  %758 = vmatprep.subr.bf16.mxu0 0
  %759 = vmatpush1.bf16.msra.mxu0 0
  %760 = vmatprep.subr.bf16.mxu0 0
  %761 = vmatpush1.bf16.msra.mxu0 0
  %762 = vmatprep.mubr.bf16.mxu0 0
  %763 = vmatmul.mubr.bf16.gmra.mrb[0].mxu0 %v728
  %v764 = vpop.f32.mrb[0].mxu0
  %v765 = vadd.f32 0.0, %v764
  %v766 = vpop.f32.mrb[0].mxu0
  %v767 = vpop.f32.mrb[0].mxu0
  %v768 = vadd.f32 0.0, %v767
  %v769 = vpop.f32.mrb[0].mxu0
  %770 = vdwg.mxu0
  %v771 = vld [vmem:[%s13] sm:$0xf]
  %v772 = vld [vmem:[%s13 + $0x4] sm:$0xf]
  %v773 = vld [vmem:[%s13 + $0x8] sm:$0xf]
  %v774 = vld [vmem:[%s13 + $0xc] sm:$0xf]
  %v775 = vld [vmem:[%s13 + $0x10] sm:$0xf]
  %v776 = vld [vmem:[%s13 + $0x14] sm:$0xf]
  %v777 = vld [vmem:[%s13 + $0x18] sm:$0xf]
  %v778 = vld [vmem:[%s13 + $0x1c] sm:$0xf]
  %v787 = vunpack.c.l.b16 %v771
  %v788 = vunpack.c.l.b16 %v772
  %v789 = vunpack.c.l.b16 %v773
  %v790 = vunpack.c.l.b16 %v774
  %v791 = vunpack.c.l.b16 %v775
  %v792 = vunpack.c.l.b16 %v776
  %v793 = vunpack.c.l.b16 %v777
  %v794 = vunpack.c.l.b16 %v778
  %v795 = vpack.c.b16 %v788, %v787
  %v796 = vpack.c.b16 %v790, %v789
  %v797 = vpack.c.b16 %v792, %v791
  %v798 = vpack.c.b16 %v794, %v793
  %803 = vmatprep.subr.bf16.mxu0 0
  %804 = vmatpush1.bf16.msra.mxu0 %v795
  %805 = vmatprep.subr.bf16.mxu0 0
  %806 = vmatpush1.bf16.msra.mxu0 %v796
  %807 = vmatprep.subr.bf16.mxu0 0
  %808 = vmatpush1.bf16.msra.mxu0 %v797
  %809 = vmatprep.subr.bf16.mxu0 0
  %810 = vmatpush1.bf16.msra.mxu0 %v798
  %811 = vmatprep.subr.bf16.mxu0 0
  %812 = vmatpush1.bf16.msra.mxu0 0
  %813 = vmatprep.subr.bf16.mxu0 0
  %814 = vmatpush1.bf16.msra.mxu0 0
  %815 = vmatprep.subr.bf16.mxu0 0
  %816 = vmatpush1.bf16.msra.mxu0 0
  %817 = vmatprep.subr.bf16.mxu0 0
  %818 = vmatpush1.bf16.msra.mxu0 0
  %819 = vmatprep.subr.bf16.mxu0 0
  %820 = vmatpush1.bf16.msra.mxu0 0
  %821 = vmatprep.subr.bf16.mxu0 0
  %822 = vmatpush1.bf16.msra.mxu0 0
  %823 = vmatprep.subr.bf16.mxu0 0
  %824 = vmatpush1.bf16.msra.mxu0 0
  %825 = vmatprep.subr.bf16.mxu0 0
  %826 = vmatpush1.bf16.msra.mxu0 0
  %827 = vmatprep.subr.bf16.mxu0 0
  %828 = vmatpush1.bf16.msra.mxu0 0
  %829 = vmatprep.subr.bf16.mxu0 0
  %830 = vmatpush1.bf16.msra.mxu0 0
  %831 = vmatprep.subr.bf16.mxu0 0
  %832 = vmatpush1.bf16.msra.mxu0 0
  %833 = vmatprep.subr.bf16.mxu0 0
  %834 = vmatpush1.bf16.msra.mxu0 0
  %835 = vmatprep.mubr.bf16.mxu0 0
  %836 = vmatmul.mubr.bf16.gmra.mrb[0].mxu0 %v728
  %v837 = vpop.f32.mrb[0].mxu0
  %v838 = vadd.f32 0.0, %v837
  %v839 = vpop.f32.mrb[0].mxu0
  %v840 = vpop.f32.mrb[0].mxu0
  %v841 = vadd.f32 0.0, %v840
  %v842 = vpop.f32.mrb[0].mxu0
  %843 = vdwg.mxu0
  %v846 = vrot.slane %v765, 1
  %v847 = vrot.slane %v768, 1
  %v848 = vsel %vm213, %v846, %v847
  %v851 = vsel %vm213, %v847, 0.0
  %v852 = vmul.f32 %v848, %v112
  %v853 = vmul.f32 %v851, %v113
  %v856 = vrot.slane %v838, 7
  %v857 = vrot.slane %v841, 7
  %v858 = vsel %vm224, %v856, %v857
  %v861 = vsel %vm224, 0.0, %v856
  %v862 = vmul.f32 %v861, %v106
  %v863 = vmul.f32 %v858, %v107
  %v872 = vunpack.c.l.b16 %v687
  %v873 = vunpack.c.l.b16 %v688
  %v874 = vunpack.c.l.b16 %v689
  %v875 = vunpack.c.l.b16 %v690
  %v876 = vunpack.c.l.b16 %v691
  %v877 = vunpack.c.l.b16 %v692
  %v878 = vunpack.c.l.b16 %v693
  %v879 = vunpack.c.l.b16 %v694
  %v880 = vpack.c.b16 %v873, %v872
  %v881 = vpack.c.b16 %v875, %v874
  %v882 = vpack.c.b16 %v877, %v876
  %v883 = vpack.c.b16 %v879, %v878
  %888 = vmatprep.subr.bf16.mxu0 0
  %889 = vmatpush1.bf16.msra.mxu0 %v880
  %890 = vmatprep.subr.bf16.mxu0 0
  %891 = vmatpush1.bf16.msra.mxu0 %v881
  %892 = vmatprep.subr.bf16.mxu0 0
  %893 = vmatpush1.bf16.msra.mxu0 %v882
  %894 = vmatprep.subr.bf16.mxu0 0
  %895 = vmatpush1.bf16.msra.mxu0 %v883
  %896 = vmatprep.subr.bf16.mxu0 0
  %897 = vmatpush1.bf16.msra.mxu0 0
  %898 = vmatprep.subr.bf16.mxu0 0
  %899 = vmatpush1.bf16.msra.mxu0 0
  %900 = vmatprep.subr.bf16.mxu0 0
  %901 = vmatpush1.bf16.msra.mxu0 0
  %902 = vmatprep.subr.bf16.mxu0 0
  %903 = vmatpush1.bf16.msra.mxu0 0
  %904 = vmatprep.subr.bf16.mxu0 0
  %905 = vmatpush1.bf16.msra.mxu0 0
  %906 = vmatprep.subr.bf16.mxu0 0
  %907 = vmatpush1.bf16.msra.mxu0 0
  %908 = vmatprep.subr.bf16.mxu0 0
  %909 = vmatpush1.bf16.msra.mxu0 0
  %910 = vmatprep.subr.bf16.mxu0 0
  %911 = vmatpush1.bf16.msra.mxu0 0
  %912 = vmatprep.subr.bf16.mxu0 0
  %913 = vmatpush1.bf16.msra.mxu0 0
  %914 = vmatprep.subr.bf16.mxu0 0
  %915 = vmatpush1.bf16.msra.mxu0 0
  %916 = vmatprep.subr.bf16.mxu0 0
  %917 = vmatpush1.bf16.msra.mxu0 0
  %918 = vmatprep.subr.bf16.mxu0 0
  %919 = vmatpush1.bf16.msra.mxu0 0
  %920 = vmatprep.mubr.bf16.mxu0 0
  %921 = vmatmul.mubr.bf16.gmra.mrb[0].mxu0 %v728
  %v922 = vpop.f32.mrb[0].mxu0
  %v923 = vadd.f32 %v852, %v922
  %v924 = vpop.f32.mrb[0].mxu0
  %v925 = vpop.f32.mrb[0].mxu0
  %v926 = vadd.f32 %v853, %v925
  %v927 = vpop.f32.mrb[0].mxu0
  %928 = vdwg.mxu0
  %v929 = vadd.f32 %v923, %v862
  %v930 = vadd.f32 %v926, %v863
  %v931 = vadd.f32 %v929, %v930
  %v932 = vrot.slane %v931, 4
  %v933 = vadd.f32 %v931, %v932
  %v934 = vrot.slane %v933, 2
  %v935 = vadd.f32 %v933, %v934
  %v936 = vrot.slane %v935, 1
  %v937 = vadd.f32 %v935, %v936
  %939 = vrot.lane.b32.xlu0 %v937, 96
  %v940 = vpop.permute.xlu0 %939
  %v942 = vadd.f32 %v937, %v940
  %943 = vrot.lane.b32.xlu0 %v937, 64
  %v944 = vpop.permute.xlu0 %943
  %v946 = vadd.f32 %v942, %v944
  %947 = vrot.lane.b32.xlu0 %v937, 32
  %v948 = vpop.permute.xlu0 %947
  %v950 = vadd.f32 %v946, %v948
  %v951 = vmul.f32 %v950, 0.015625
  %953 = vrot.lane.b32.xlu0 %v951, 32
  %v954 = vpop.permute.xlu0 %953
  %956 = vrot.lane.b32.xlu0 %v951, 64
  %v957 = vpop.permute.xlu0 %956
  %959 = vrot.lane.b32.xlu0 %v951, 96
  %v960 = vpop.permute.xlu0 %959
  %v962 = vsel %vm299, %v951, %v954
  %v963 = vsel %vm279, %v962, %v957
  %vm964 = vcmask 785408
  %v965 = vsel %vm964, %v963, %v960
  %v966 = vlaneseq
  %v967 = vshrl.u32 %v966, 7
  %v968 = vsub.s32 0, %v967
  %v969 = vrot.slane %v965, %v968
  %v970 = vsub.f32 %v929, %v969
  %v971 = vsub.f32 %v930, %v969
  %v972 = vmul.f32 %v970, %v970
  %v973 = vmul.f32 %v971, %v971
  %v974 = vadd.f32 %v972, %v973
  %v975 = vrot.slane %v974, 4
  %v976 = vadd.f32 %v974, %v975
  %v977 = vrot.slane %v976, 2
  %v978 = vadd.f32 %v976, %v977
  %v979 = vrot.slane %v978, 1
  %v980 = vadd.f32 %v978, %v979
  %982 = vrot.lane.b32.xlu0 %v980, 96
  %v983 = vpop.permute.xlu0 %982
  %v985 = vadd.f32 %v980, %v983
  %986 = vrot.lane.b32.xlu0 %v980, 64
  %v987 = vpop.permute.xlu0 %986
  %v989 = vadd.f32 %v985, %v987
  %990 = vrot.lane.b32.xlu0 %v980, 32
  %v991 = vpop.permute.xlu0 %990
  %v993 = vadd.f32 %v989, %v991
  %v994 = vmul.f32 %v993, 0.015625
  %v995 = vld [vmem:[%s14] sm:$0x1]
  %v996 = vadd.f32 %v994, 1e-05
  %v997 = vrsqrt.pop %v996
  %v998 = vmul.f32 %v995, %v997
  %v1000 = vlaneseq
  %v1001 = vshrl.u32 %v1000, 7
  %v1002 = vsub.s32 0, %v1001
  %v1003 = vrot.slane %v998, %v1002
  %1004 = vrot.lane.b32.xlu0 %v1003, 32
  %v1005 = vpop.permute.xlu0 %1004
  %1007 = vrot.lane.b32.xlu0 %v1003, 64
  %v1008 = vpop.permute.xlu0 %1007
  %1010 = vrot.lane.b32.xlu0 %v1003, 96
  %v1011 = vpop.permute.xlu0 %1010
  %v1013 = vsel %vm299, %v998, %v1005
  %v1014 = vsel %vm279, %v1013, %v1008
  %v1015 = vsel %vm964, %v1014, %v1011
  %v1016 = vld [vmem:[%s15] sm:$0x1]
  %v1018 = vlaneseq
  %v1019 = vshrl.u32 %v1018, 7
  %v1020 = vsub.s32 0, %v1019
  %v1021 = vrot.slane %v1016, %v1020
  %1022 = vrot.lane.b32.xlu0 %v1021, 32
  %v1023 = vpop.permute.xlu0 %1022
  %1025 = vrot.lane.b32.xlu0 %v1021, 64
  %v1026 = vpop.permute.xlu0 %1025
  %1028 = vrot.lane.b32.xlu0 %v1021, 96
  %v1029 = vpop.permute.xlu0 %1028
  %v1031 = vsel %vm299, %v1016, %v1023
  %v1032 = vsel %vm279, %v1031, %v1026
  %v1033 = vsel %vm964, %v1032, %v1029
  %v1034 = vlaneseq
  %v1035 = vshrl.u32 %v1034, 7
  %v1036 = vsub.s32 0, %v1035
  %v1037 = vrot.slane %v1015, %v1036
  %v1038 = vmul.f32 %v970, %v1037
  %v1039 = vmul.f32 %v971, %v1037
  %v1040 = vlaneseq
  %v1041 = vshrl.u32 %v1040, 7
  %v1042 = vsub.s32 0, %v1041
  %v1043 = vrot.slane %v1033, %v1042
  %v1044 = vadd.f32 %v1038, %v1043
  %v1045 = vadd.f32 %v1039, %v1043
  %v1046 = vmax.f32 %v1044, 0.0
  %v1047 = vmax.f32 %v1045, 0.0
  %v1048 = vpack.c.bf16 %v1047, %v1046
  %v1049 = vld [vmem:[%s17] sm:$0xf]
  %v1050 = vld [vmem:[%s17 + $0x4] sm:$0xf]
  %v1051 = vld [vmem:[%s17 + $0x8] sm:$0xf]
  %v1052 = vld [vmem:[%s17 + $0xc] sm:$0xf]
  %v1053 = vld [vmem:[%s17 + $0x10] sm:$0xf]
  %v1054 = vld [vmem:[%s17 + $0x14] sm:$0xf]
  %v1055 = vld [vmem:[%s17 + $0x18] sm:$0xf]
  %v1056 = vld [vmem:[%s17 + $0x1c] sm:$0xf]
  %v1057 = vld [vmem:[%s17 + $0x20] sm:$0xf]
  %v1058 = vld [vmem:[%s17 + $0x24] sm:$0xf]
  %v1059 = vld [vmem:[%s17 + $0x28] sm:$0xf]
  %v1060 = vld [vmem:[%s17 + $0x2c] sm:$0xf]
  %v1061 = vld [vmem:[%s17 + $0x30] sm:$0xf]
  %v1062 = vld [vmem:[%s17 + $0x34] sm:$0xf]
  %v1063 = vld [vmem:[%s17 + $0x38] sm:$0xf]
  %v1064 = vld [vmem:[%s17 + $0x3c] sm:$0xf]
  %v1065 = vld [vmem:[%s16] sm:$0xf]
  %v1066 = vld [vmem:[%s16 + $0x4] sm:$0xf]
  %v1067 = vld [vmem:[%s16 + $0x8] sm:$0xf]
  %v1068 = vld [vmem:[%s16 + $0xc] sm:$0xf]
  %v1069 = vld [vmem:[%s16 + $0x10] sm:$0xf]
  %v1070 = vld [vmem:[%s16 + $0x14] sm:$0xf]
  %v1071 = vld [vmem:[%s16 + $0x18] sm:$0xf]
  %v1072 = vld [vmem:[%s16 + $0x1c] sm:$0xf]
  %v1073 = vld [vmem:[%s16 + $0x20] sm:$0xf]
  %v1074 = vld [vmem:[%s16 + $0x24] sm:$0xf]
  %v1075 = vld [vmem:[%s16 + $0x28] sm:$0xf]
  %v1076 = vld [vmem:[%s16 + $0x2c] sm:$0xf]
  %v1077 = vld [vmem:[%s16 + $0x30] sm:$0xf]
  %v1078 = vld [vmem:[%s16 + $0x34] sm:$0xf]
  %v1079 = vld [vmem:[%s16 + $0x38] sm:$0xf]
  %v1080 = vld [vmem:[%s16 + $0x3c] sm:$0xf]
  %v1097 = vunpack.c.l.b16 %v1065
  %v1098 = vunpack.c.l.b16 %v1066
  %v1099 = vunpack.c.l.b16 %v1067
  %v1100 = vunpack.c.l.b16 %v1068
  %v1101 = vunpack.c.l.b16 %v1069
  %v1102 = vunpack.c.l.b16 %v1070
  %v1103 = vunpack.c.l.b16 %v1071
  %v1104 = vunpack.c.l.b16 %v1072
  %v1105 = vunpack.c.l.b16 %v1073
  %v1106 = vunpack.c.l.b16 %v1074
  %v1107 = vunpack.c.l.b16 %v1075
  %v1108 = vunpack.c.l.b16 %v1076
  %v1109 = vunpack.c.l.b16 %v1077
  %v1110 = vunpack.c.l.b16 %v1078
  %v1111 = vunpack.c.l.b16 %v1079
  %v1112 = vunpack.c.l.b16 %v1080
  %v1113 = vpack.c.b16 %v1098, %v1097
  %v1114 = vpack.c.b16 %v1100, %v1099
  %v1115 = vpack.c.b16 %v1102, %v1101
  %v1116 = vpack.c.b16 %v1104, %v1103
  %v1117 = vpack.c.b16 %v1106, %v1105
  %v1118 = vpack.c.b16 %v1108, %v1107
  %v1119 = vpack.c.b16 %v1110, %v1109
  %v1120 = vpack.c.b16 %v1112, %v1111
  %1129 = vmatprep.subr.bf16.mxu0 0
  %1130 = vmatpush1.bf16.msra.mxu0 %v1113
  %1131 = vmatprep.subr.bf16.mxu0 0
  %1132 = vmatpush1.bf16.msra.mxu0 %v1114
  %1133 = vmatprep.subr.bf16.mxu0 0
  %1134 = vmatpush1.bf16.msra.mxu0 %v1115
  %1135 = vmatprep.subr.bf16.mxu0 0
  %1136 = vmatpush1.bf16.msra.mxu0 %v1116
  %1137 = vmatprep.subr.bf16.mxu0 0
  %1138 = vmatpush1.bf16.msra.mxu0 %v1117
  %1139 = vmatprep.subr.bf16.mxu0 0
  %1140 = vmatpush1.bf16.msra.mxu0 %v1118
  %1141 = vmatprep.subr.bf16.mxu0 0
  %1142 = vmatpush1.bf16.msra.mxu0 %v1119
  %1143 = vmatprep.subr.bf16.mxu0 0
  %1144 = vmatpush1.bf16.msra.mxu0 %v1120
  %1145 = vmatprep.subr.bf16.mxu0 0
  %1146 = vmatpush1.bf16.msra.mxu0 0
  %1147 = vmatprep.subr.bf16.mxu0 0
  %1148 = vmatpush1.bf16.msra.mxu0 0
  %1149 = vmatprep.subr.bf16.mxu0 0
  %1150 = vmatpush1.bf16.msra.mxu0 0
  %1151 = vmatprep.subr.bf16.mxu0 0
  %1152 = vmatpush1.bf16.msra.mxu0 0
  %1153 = vmatprep.subr.bf16.mxu0 0
  %1154 = vmatpush1.bf16.msra.mxu0 0
  %1155 = vmatprep.subr.bf16.mxu0 0
  %1156 = vmatpush1.bf16.msra.mxu0 0
  %1157 = vmatprep.subr.bf16.mxu0 0
  %1158 = vmatpush1.bf16.msra.mxu0 0
  %1159 = vmatprep.subr.bf16.mxu0 0
  %1160 = vmatpush1.bf16.msra.mxu0 0
  %1161 = vmatprep.mubr.bf16.mxu0 0
  %1162 = vmatmul.mubr.bf16.gmra.mrb[0].mxu0 %v1048
  %v1163 = vpop.f32.mrb[0].mxu0
  %v1164 = vadd.f32 0.0, %v1163
  %v1165 = vpop.f32.mrb[0].mxu0
  %v1166 = vpop.f32.mrb[0].mxu0
  %v1167 = vadd.f32 0.0, %v1166
  %v1168 = vpop.f32.mrb[0].mxu0
  %1169 = vdwg.mxu0
  %v1170 = vld [vmem:[%s18] sm:$0xf]
  %v1171 = vld [vmem:[%s18 + $0x4] sm:$0xf]
  %v1172 = vld [vmem:[%s18 + $0x8] sm:$0xf]
  %v1173 = vld [vmem:[%s18 + $0xc] sm:$0xf]
  %v1174 = vld [vmem:[%s18 + $0x10] sm:$0xf]
  %v1175 = vld [vmem:[%s18 + $0x14] sm:$0xf]
  %v1176 = vld [vmem:[%s18 + $0x18] sm:$0xf]
  %v1177 = vld [vmem:[%s18 + $0x1c] sm:$0xf]
  %v1178 = vld [vmem:[%s18 + $0x20] sm:$0xf]
  %v1179 = vld [vmem:[%s18 + $0x24] sm:$0xf]
  %v1180 = vld [vmem:[%s18 + $0x28] sm:$0xf]
  %v1181 = vld [vmem:[%s18 + $0x2c] sm:$0xf]
  %v1182 = vld [vmem:[%s18 + $0x30] sm:$0xf]
  %v1183 = vld [vmem:[%s18 + $0x34] sm:$0xf]
  %v1184 = vld [vmem:[%s18 + $0x38] sm:$0xf]
  %v1185 = vld [vmem:[%s18 + $0x3c] sm:$0xf]
  %v1202 = vunpack.c.l.b16 %v1170
  %v1203 = vunpack.c.l.b16 %v1171
  %v1204 = vunpack.c.l.b16 %v1172
  %v1205 = vunpack.c.l.b16 %v1173
  %v1206 = vunpack.c.l.b16 %v1174
  %v1207 = vunpack.c.l.b16 %v1175
  %v1208 = vunpack.c.l.b16 %v1176
  %v1209 = vunpack.c.l.b16 %v1177
  %v1210 = vunpack.c.l.b16 %v1178
  %v1211 = vunpack.c.l.b16 %v1179
  %v1212 = vunpack.c.l.b16 %v1180
  %v1213 = vunpack.c.l.b16 %v1181
  %v1214 = vunpack.c.l.b16 %v1182
  %v1215 = vunpack.c.l.b16 %v1183
  %v1216 = vunpack.c.l.b16 %v1184
  %v1217 = vunpack.c.l.b16 %v1185
  %v1218 = vpack.c.b16 %v1203, %v1202
  %v1219 = vpack.c.b16 %v1205, %v1204
  %v1220 = vpack.c.b16 %v1207, %v1206
  %v1221 = vpack.c.b16 %v1209, %v1208
  %v1222 = vpack.c.b16 %v1211, %v1210
  %v1223 = vpack.c.b16 %v1213, %v1212
  %v1224 = vpack.c.b16 %v1215, %v1214
  %v1225 = vpack.c.b16 %v1217, %v1216
  %1234 = vmatprep.subr.bf16.mxu0 0
  %1235 = vmatpush1.bf16.msra.mxu0 %v1218
  %1236 = vmatprep.subr.bf16.mxu0 0
  %1237 = vmatpush1.bf16.msra.mxu0 %v1219
  %1238 = vmatprep.subr.bf16.mxu0 0
  %1239 = vmatpush1.bf16.msra.mxu0 %v1220
  %1240 = vmatprep.subr.bf16.mxu0 0
  %1241 = vmatpush1.bf16.msra.mxu0 %v1221
  %1242 = vmatprep.subr.bf16.mxu0 0
  %1243 = vmatpush1.bf16.msra.mxu0 %v1222
  %1244 = vmatprep.subr.bf16.mxu0 0
  %1245 = vmatpush1.bf16.msra.mxu0 %v1223
  %1246 = vmatprep.subr.bf16.mxu0 0
  %1247 = vmatpush1.bf16.msra.mxu0 %v1224
  %1248 = vmatprep.subr.bf16.mxu0 0
  %1249 = vmatpush1.bf16.msra.mxu0 %v1225
  %1250 = vmatprep.subr.bf16.mxu0 0
  %1251 = vmatpush1.bf16.msra.mxu0 0
  %1252 = vmatprep.subr.bf16.mxu0 0
  %1253 = vmatpush1.bf16.msra.mxu0 0
  %1254 = vmatprep.subr.bf16.mxu0 0
  %1255 = vmatpush1.bf16.msra.mxu0 0
  %1256 = vmatprep.subr.bf16.mxu0 0
  %1257 = vmatpush1.bf16.msra.mxu0 0
  %1258 = vmatprep.subr.bf16.mxu0 0
  %1259 = vmatpush1.bf16.msra.mxu0 0
  %1260 = vmatprep.subr.bf16.mxu0 0
  %1261 = vmatpush1.bf16.msra.mxu0 0
  %1262 = vmatprep.subr.bf16.mxu0 0
  %1263 = vmatpush1.bf16.msra.mxu0 0
  %1264 = vmatprep.subr.bf16.mxu0 0
  %1265 = vmatpush1.bf16.msra.mxu0 0
  %1266 = vmatprep.mubr.bf16.mxu0 0
  %1267 = vmatmul.mubr.bf16.gmra.mrb[0].mxu0 %v1048
  %v1268 = vpop.f32.mrb[0].mxu0
  %v1269 = vadd.f32 0.0, %v1268
  %v1270 = vpop.f32.mrb[0].mxu0
  %v1271 = vpop.f32.mrb[0].mxu0
  %v1272 = vadd.f32 0.0, %v1271
  %v1273 = vpop.f32.mrb[0].mxu0
  %1274 = vdwg.mxu0
  %v1277 = vrot.slane %v1164, 1
  %v1278 = vrot.slane %v1167, 1
  %v1279 = vsel %vm213, %v1277, %v1278
  %v1282 = vsel %vm213, %v1278, 0.0
  %v1283 = vmul.f32 %v1279, %v112
  %v1284 = vmul.f32 %v1282, %v113
  %v1287 = vrot.slane %v1269, 7
  %v1288 = vrot.slane %v1272, 7
  %v1289 = vsel %vm224, %v1287, %v1288
  %v1292 = vsel %vm224, 0.0, %v1287
  %v1293 = vmul.f32 %v1292, %v106
  %v1294 = vmul.f32 %v1289, %v107
  %v1311 = vunpack.c.l.b16 %v1049
  %v1312 = vunpack.c.l.b16 %v1050
  %v1313 = vunpack.c.l.b16 %v1051
  %v1314 = vunpack.c.l.b16 %v1052
  %v1315 = vunpack.c.l.b16 %v1053
  %v1316 = vunpack.c.l.b16 %v1054
  %v1317 = vunpack.c.l.b16 %v1055
  %v1318 = vunpack.c.l.b16 %v1056
  %v1319 = vunpack.c.l.b16 %v1057
  %v1320 = vunpack.c.l.b16 %v1058
  %v1321 = vunpack.c.l.b16 %v1059
  %v1322 = vunpack.c.l.b16 %v1060
  %v1323 = vunpack.c.l.b16 %v1061
  %v1324 = vunpack.c.l.b16 %v1062
  %v1325 = vunpack.c.l.b16 %v1063
  %v1326 = vunpack.c.l.b16 %v1064
  %v1327 = vpack.c.b16 %v1312, %v1311
  %v1328 = vpack.c.b16 %v1314, %v1313
  %v1329 = vpack.c.b16 %v1316, %v1315
  %v1330 = vpack.c.b16 %v1318, %v1317
  %v1331 = vpack.c.b16 %v1320, %v1319
  %v1332 = vpack.c.b16 %v1322, %v1321
  %v1333 = vpack.c.b16 %v1324, %v1323
  %v1334 = vpack.c.b16 %v1326, %v1325
  %1343 = vmatprep.subr.bf16.mxu0 0
  %1344 = vmatpush1.bf16.msra.mxu0 %v1327
  %1345 = vmatprep.subr.bf16.mxu0 0
  %1346 = vmatpush1.bf16.msra.mxu0 %v1328
  %1347 = vmatprep.subr.bf16.mxu0 0
  %1348 = vmatpush1.bf16.msra.mxu0 %v1329
  %1349 = vmatprep.subr.bf16.mxu0 0
  %1350 = vmatpush1.bf16.msra.mxu0 %v1330
  %1351 = vmatprep.subr.bf16.mxu0 0
  %1352 = vmatpush1.bf16.msra.mxu0 %v1331
  %1353 = vmatprep.subr.bf16.mxu0 0
  %1354 = vmatpush1.bf16.msra.mxu0 %v1332
  %1355 = vmatprep.subr.bf16.mxu0 0
  %1356 = vmatpush1.bf16.msra.mxu0 %v1333
  %1357 = vmatprep.subr.bf16.mxu0 0
  %1358 = vmatpush1.bf16.msra.mxu0 %v1334
  %1359 = vmatprep.subr.bf16.mxu0 0
  %1360 = vmatpush1.bf16.msra.mxu0 0
  %1361 = vmatprep.subr.bf16.mxu0 0
  %1362 = vmatpush1.bf16.msra.mxu0 0
  %1363 = vmatprep.subr.bf16.mxu0 0
  %1364 = vmatpush1.bf16.msra.mxu0 0
  %1365 = vmatprep.subr.bf16.mxu0 0
  %1366 = vmatpush1.bf16.msra.mxu0 0
  %1367 = vmatprep.subr.bf16.mxu0 0
  %1368 = vmatpush1.bf16.msra.mxu0 0
  %1369 = vmatprep.subr.bf16.mxu0 0
  %1370 = vmatpush1.bf16.msra.mxu0 0
  %1371 = vmatprep.subr.bf16.mxu0 0
  %1372 = vmatpush1.bf16.msra.mxu0 0
  %1373 = vmatprep.subr.bf16.mxu0 0
  %1374 = vmatpush1.bf16.msra.mxu0 0
  %1375 = vmatprep.mubr.bf16.mxu0 0
  %1376 = vmatmul.mubr.bf16.gmra.mrb[0].mxu0 %v1048
  %v1377 = vpop.f32.mrb[0].mxu0
  %v1378 = vadd.f32 %v1283, %v1377
  %v1379 = vpop.f32.mrb[0].mxu0
  %v1380 = vpop.f32.mrb[0].mxu0
  %v1381 = vadd.f32 %v1284, %v1380
  %v1382 = vpop.f32.mrb[0].mxu0
  %1383 = vdwg.mxu0
  %v1384 = vadd.f32 %v1378, %v1293
  %v1385 = vadd.f32 %v1381, %v1294
  %vm1386 = vcmask 31744
  %v1387 = vsel %vm1386, %v1384, 0.0
  %v1388 = vsel %vm1386, %v1385, 0.0
  %v1389 = vadd.f32 %v1387, %v1388
  %v1390 = vrot.slane %v1389, 4
  %v1391 = vadd.f32 %v1389, %v1390
  %v1392 = vrot.slane %v1391, 2
  %v1393 = vadd.f32 %v1391, %v1392
  %v1394 = vrot.slane %v1393, 1
  %v1395 = vadd.f32 %v1393, %v1394
  %1397 = vrot.lane.b32.xlu0 %v1395, 127
  %v1398 = vpop.permute.xlu0 %1397
  %v1400 = vadd.f32 %v1395, %v1398
  %1401 = vrot.lane.b32.xlu0 %v1395, 126
  %v1402 = vpop.permute.xlu0 %1401
  %v1404 = vadd.f32 %v1400, %v1402
  %1405 = vrot.lane.b32.xlu0 %v1395, 125
  %v1406 = vpop.permute.xlu0 %1405
  %v1408 = vadd.f32 %v1404, %v1406
  %v1409 = vmul.f32 %v1408, 0.015625
  %1411 = vrot.lane.b32.xlu0 %v1409, 1
  %v1412 = vpop.permute.xlu0 %1411
  %1414 = vrot.lane.b32.xlu0 %v1409, 2
  %v1415 = vpop.permute.xlu0 %1414
  %1417 = vrot.lane.b32.xlu0 %v1409, 3
  %v1418 = vpop.permute.xlu0 %1417
  %vm1420 = vcmask 7168
  %v1421 = vsel %vm1420, %v1409, %v1412
  %vm1422 = vcmask 15360
  %v1423 = vsel %vm1422, %v1421, %v1415
  %vm1424 = vcmask 23552
  %v1425 = vsel %vm1424, %v1423, %v1418
  %v1426 = vlaneseq
  %v1427 = vshrl.u32 %v1426, 7
  %v1428 = vsub.s32 0, %v1427
  %v1429 = vrot.slane %v1425, %v1428
  %v1430 = vsub.f32 %v1384, %v1429
  %v1431 = vsub.f32 %v1385, %v1429
  %v1432 = vmul.f32 %v1430, %v1430
  %v1433 = vmul.f32 %v1431, %v1431
  %v1434 = vsel %vm1386, %v1432, 0.0
  %v1435 = vsel %vm1386, %v1433, 0.0
  %v1436 = vadd.f32 %v1434, %v1435
  %v1437 = vrot.slane %v1436, 4
  %v1438 = vadd.f32 %v1436, %v1437
  %v1439 = vrot.slane %v1438, 2
  %v1440 = vadd.f32 %v1438, %v1439
  %v1441 = vrot.slane %v1440, 1
  %v1442 = vadd.f32 %v1440, %v1441
  %1444 = vrot.lane.b32.xlu0 %v1442, 127
  %v1445 = vpop.permute.xlu0 %1444
  %v1447 = vadd.f32 %v1442, %v1445
  %1448 = vrot.lane.b32.xlu0 %v1442, 126
  %v1449 = vpop.permute.xlu0 %1448
  %v1451 = vadd.f32 %v1447, %v1449
  %1452 = vrot.lane.b32.xlu0 %v1442, 125
  %v1453 = vpop.permute.xlu0 %1452
  %v1455 = vadd.f32 %v1451, %v1453
  %v1456 = vmul.f32 %v1455, 0.015625
  %v1457 = vld [vmem:[#allocation2] sm:$0x1]
  %v1458 = vadd.f32 %v1456, 1e-05
  %v1459 = vrsqrt.pop %v1458
  %v1460 = vmul.f32 %v1457, %v1459
  %v1462 = vlaneseq
  %v1463 = vshrl.u32 %v1462, 7
  %v1464 = vsub.s32 0, %v1463
  %v1465 = vrot.slane %v1460, %v1464
  %1466 = vrot.lane.b32.xlu0 %v1465, 1
  %v1467 = vpop.permute.xlu0 %1466
  %1469 = vrot.lane.b32.xlu0 %v1465, 2
  %v1470 = vpop.permute.xlu0 %1469
  %1472 = vrot.lane.b32.xlu0 %v1465, 3
  %v1473 = vpop.permute.xlu0 %1472
  %v1475 = vsel %vm1420, %v1460, %v1467
  %v1476 = vsel %vm1422, %v1475, %v1470
  %v1477 = vsel %vm1424, %v1476, %v1473
  %v1478 = vld [vmem:[#allocation3] sm:$0x1]
  %v1480 = vlaneseq
  %v1481 = vshrl.u32 %v1480, 7
  %v1482 = vsub.s32 0, %v1481
  %v1483 = vrot.slane %v1478, %v1482
  %1484 = vrot.lane.b32.xlu0 %v1483, 1
  %v1485 = vpop.permute.xlu0 %1484
  %1487 = vrot.lane.b32.xlu0 %v1483, 2
  %v1488 = vpop.permute.xlu0 %1487
  %1490 = vrot.lane.b32.xlu0 %v1483, 3
  %v1491 = vpop.permute.xlu0 %1490
  %v1493 = vsel %vm1420, %v1478, %v1485
  %v1494 = vsel %vm1422, %v1493, %v1488
  %v1495 = vsel %vm1424, %v1494, %v1491
  %v1496 = vlaneseq
  %v1497 = vshrl.u32 %v1496, 7
  %v1498 = vsub.s32 0, %v1497
  %v1499 = vrot.slane %v1477, %v1498
  %v1500 = vmul.f32 %v1430, %v1499
  %v1501 = vmul.f32 %v1431, %v1499
  %v1502 = vlaneseq
  %v1503 = vshrl.u32 %v1502, 7
  %v1504 = vsub.s32 0, %v1503
  %v1505 = vrot.slane %v1495, %v1504
  %v1506 = vadd.f32 %v1500, %v1505
  %v1507 = vadd.f32 %v1501, %v1505
  %v1508 = vmax.f32 %v1506, 0.0
  %v1509 = vmax.f32 %v1507, 0.0
  %1510 = vst.msk [vmem:[%s21] sm:$0xff] %vm1386, %v1508
  %1511 = vst.msk [vmem:[%s21 + $0x8] sm:$0xff] %vm1386, %v1509
  // Predicated region
  $region86: #{tpu_custom_call.1} parent=0 // pred_check
    _
  $region87: #{tpu_custom_call.1} parent=0 // pred_check_branch
    %1513 = sbr.rel (0) target = $region89
  $region88: #{tpu_custom_call.1} parent=0 // pred_region
    _
  $region89: #{tpu_custom_call.1} parent=0 // pred_fallthru
    _
  // Predicated region
  $region90: #{tpu_custom_call.1} parent=0 // pred_check
    _
  $region91: #{tpu_custom_call.1} parent=0 // pred_check_branch
    %1515 = sbr.rel (0) target = $region93
  $region92: #{tpu_custom_call.1} parent=0 // pred_region
    _
  $region93: #{tpu_custom_call.1} parent=0 // pred_fallthru
    _

</llo_original>
